<compile_context>
chip_gen: v7x
topology: tpu7x:2x2x1
jax: 0.10.0
libtpu: 0.0.40
codegen_flags: <defaults>
</compile_context>

<pallas_src>
import functools

import numpy as np
import jax
import jax.numpy as jnp
from jax.experimental import pallas as pl
from jax.experimental.pallas import tpu as pltpu


_VMEM_LIMIT = 32 * 1024 * 1024          # safe scoped limit on v5e / v6e / v7x
_LAYER_TN = (512, 512, 512, 256)        # output-column tile for conv layers 1..4


def _round_up(x, m):
    return (x + m - 1) // m * m


# ----------------------------------------------------------------------------
# FC kernel:  out = (noise @ W) + b      (bf16 operands, f32 accumulate)
# ----------------------------------------------------------------------------
def _fc_kernel(a_ref, w_ref, b_ref, o_ref):
    y = jnp.dot(a_ref[...], w_ref[...], preferred_element_type=jnp.float32)
    o_ref[...] = (y + b_ref[...]).astype(o_ref.dtype)


def fc_forward(noise, w_bf16, bias_row, *, tn=4096):
    B, K = noise.shape
    N = w_bf16.shape[1]
    assert N % tn == 0
    Bp = _round_up(max(B, 8), 8)
    a = jnp.pad(noise.astype(jnp.bfloat16), ((0, Bp - B), (0, 0)))
    out = pl.pallas_call(
        _fc_kernel,
        out_shape=jax.ShapeDtypeStruct((Bp, N), jnp.bfloat16),
        grid_spec=pltpu.PrefetchScalarGridSpec(
            num_scalar_prefetch=0,
            grid=(N // tn,),
            in_specs=[
                pl.BlockSpec((Bp, K), lambda j: (0, 0)),   # K=100 kept unpadded
                pl.BlockSpec((K, tn), lambda j: (0, j)),
                pl.BlockSpec((1, tn), lambda j: (0, j)),
            ],
            out_specs=pl.BlockSpec((Bp, tn), lambda j: (0, j)),
        ),
        compiler_params=pltpu.CompilerParams(
            dimension_semantics=("parallel",),
            vmem_limit_bytes=_VMEM_LIMIT),
    )(a, w_bf16, bias_row)
    return out[:B]


# ----------------------------------------------------------------------------
# Weight packing: PyTorch ConvTranspose2d weight (Cin, Cout, 6, 6) ->
# (9, Cin, 4*Cout) bf16.  Tap t = 3a+b uses kernel rows kh = p + 4 - 2a,
# kw = q + 4 - 2b; output columns are ordered (p, q, co).  Optionally the
# per-output-channel BN scale is folded in, and/or the result is transposed
# to (9, 4*Cout, Cin) for the Cout=1 transposed-operand kernel.
# ----------------------------------------------------------------------------
def pack_conv_weight(w_iohw, scale_co=None, transpose_out=False):
    cin, cout = w_iohw.shape[0], w_iohw.shape[1]
    wt = jnp.transpose(w_iohw, (2, 3, 0, 1))               # (kh, kw, ci, co)
    taps = []
    for a in range(3):
        for b in range(3):
            sub = wt[4 - 2 * a:6 - 2 * a, 4 - 2 * b:6 - 2 * b]   # (p, q, ci, co)
            blk = jnp.transpose(sub, (2, 0, 1, 3)).reshape(cin, 4 * cout)
            taps.append(blk)
    w9 = jnp.stack(taps, axis=0)                            # (9, cin, 4*cout)
    if scale_co is not None:                                # fold BN scale
        w9 = w9 * jnp.tile(scale_co, 4)[None, None, :]
    if transpose_out:
        w9 = jnp.transpose(w9, (0, 2, 1))                   # (9, 4*cout, cin)
    return w9.astype(jnp.bfloat16)


# ----------------------------------------------------------------------------
# Transposed-conv kernel for Cout >= 64 layers (layers 1-4).
# Whole flattened padded input resides in VMEM; 9 accumulating MXU dots
# (K = Cin per tap); epilogue is shift + LeakyReLU.
# ----------------------------------------------------------------------------
def _conv_kernel(x_ref, w_ref, t_ref, o_ref, acc_ref, *, offs, tm, act):
    # x_ref: (Lp, Cin)  bf16   flattened 1-padded input of one batch element
    # w_ref: (9, Cin, tn) bf16 scale-folded phase weights tile
    # t_ref: (1, tn)   f32     per-column shift (folded BN, or bias)
    # o_ref: (tm, tn)          output tile
    # acc_ref: (tm, tn) f32    accumulator scratch
    acc_ref[...] = jnp.dot(x_ref[offs[0]:offs[0] + tm, :], w_ref[0],
                           preferred_element_type=jnp.float32)
    for t in range(1, 9):
        off = offs[t]
        acc_ref[...] += jnp.dot(x_ref[off:off + tm, :], w_ref[t],
                                preferred_element_type=jnp.float32)
    y = acc_ref[...] + t_ref[...]
    if act == "leaky":
        y = jnp.where(y >= 0.0, y, 0.2 * y)
    o_ref[...] = y.astype(o_ref.dtype)


def conv_transpose_s2k6p2(x_nhwc, wmat, shift_row, act, *, tn, out_dtype):
    """x_nhwc: (B, H, W, Cin);  wmat: (9, Cin, 4*Cout) bf16 packed weights.
    Returns (B, 2H, 2W, Cout)."""
    assert act in ("none", "leaky")
    B, H, W, Cin = x_nhwc.shape
    nmat = wmat.shape[2]
    cout = nmat // 4
    S = W + 2                              # padded row stride
    m_out = H * S                          # outputs incl. 2 garbage cols / row
    tm = _round_up(m_out, 8)
    lp = _round_up(max((H + 2) * S, tm + 2 * S + 2), 8)

    # Glue: pad spatially by 1, flatten rows, pad length (zeros).  No channel
    # padding, no halo duplication -- the whole input is one VMEM block.
    xp = jnp.pad(x_nhwc.astype(jnp.bfloat16), ((0, 0), (1, 1), (1, 1), (0, 0)))
    xf = xp.reshape(B, (H + 2) * S, Cin)
    xf = jnp.pad(xf, ((0, 0), (0, lp - (H + 2) * S), (0, 0)))

    tn_eff = min(tn, nmat)
    assert nmat % tn_eff == 0
    n_tiles = nmat // tn_eff
    offs = tuple(a * S + b for a in range(3) for b in range(3))

    kernel = functools.partial(_conv_kernel, offs=offs, tm=tm, act=act)
    out = pl.pallas_call(
        kernel,
        out_shape=jax.ShapeDtypeStruct((B, tm, nmat), out_dtype),
        grid_spec=pltpu.PrefetchScalarGridSpec(
            num_scalar_prefetch=0,
            grid=(n_tiles, B),
            in_specs=[
                pl.BlockSpec((None, lp, Cin), lambda j, b: (b, 0, 0)),
                pl.BlockSpec((9, Cin, tn_eff), lambda j, b: (0, 0, j)),
                pl.BlockSpec((1, tn_eff), lambda j, b: (0, j)),
            ],
            out_specs=pl.BlockSpec((None, tm, tn_eff), lambda j, b: (b, 0, j)),
            scratch_shapes=[pltpu.VMEM((tm, tn_eff), jnp.float32)],
        ),
        compiler_params=pltpu.CompilerParams(
            dimension_semantics=("parallel", "parallel"),
            vmem_limit_bytes=_VMEM_LIMIT),
    )(xf, wmat, shift_row)

    # De-interleave the 4 sub-pixel phases, drop the 2 garbage cols per row.
    y = out[:, :m_out, :].reshape(B, H, S, 2, 2, cout)[:, :, :W]
    y = jnp.transpose(y, (0, 1, 3, 2, 4, 5)).reshape(B, 2 * H, 2 * W, cout)
    return y


# ----------------------------------------------------------------------------
# Transposed-operand kernel for the final Cout=1 layer:
#   out^T(4, M) += W_tap(4, Cin) @ x^T(Cin, M)  for each of the 9 taps.
# The matmul N dimension is the full spatial axis (lane dense), not 4.
# ----------------------------------------------------------------------------
def _conv1_kernel(x_ref, w_ref, b_ref, o_ref, acc_ref, *, offs, mo, act):
    # x_ref: (Cin, Lp) bf16  channel-major flattened 1-padded input (one batch)
    # w_ref: (9, 4, Cin) bf16;  b_ref: (4, 1) f32
    # o_ref / acc_ref: (4, mo) f32
    for t, off in enumerate(offs):
        part = jnp.dot(w_ref[t], x_ref[:, off:off + mo],
                       preferred_element_type=jnp.float32)
        if t == 0:
            acc_ref[...] = part
        else:
            acc_ref[...] += part
    y = acc_ref[...] + b_ref[...]
    if act == "tanh":
        y = jnp.tanh(y)
    o_ref[...] = y


def conv_transpose_s2k6p2_cout1(x_nhwc, wmat_t, shift_col, act):
    """Final ConvTranspose2d(Cin, 1, 6, 2, 2).  x_nhwc (B, H, W, Cin) ->
    (B, 2H, 2W) float32.  wmat_t: (9, 4, Cin) bf16; shift_col: (4, 1) f32."""
    assert act in ("none", "tanh")
    B, H, W, C = x_nhwc.shape
    S = W + 2
    mo = H * S
    lp = _round_up(max((H + 2) * S, mo + 2 * S + 2), 128)

    xp = jnp.pad(x_nhwc.astype(jnp.bfloat16), ((0, 0), (1, 1), (1, 1), (0, 0)))
    xt = jnp.transpose(xp, (0, 3, 1, 2)).reshape(B, C, (H + 2) * S)
    xt = jnp.pad(xt, ((0, 0), (0, 0), (0, lp - (H + 2) * S)))

    offs = tuple(a * S + b for a in range(3) for b in range(3))
    kernel = functools.partial(_conv1_kernel, offs=offs, mo=mo, act=act)
    out = pl.pallas_call(
        kernel,
        out_shape=jax.ShapeDtypeStruct((B, 4, mo), jnp.float32),
        grid_spec=pltpu.PrefetchScalarGridSpec(
            num_scalar_prefetch=0,
            grid=(B,),
            in_specs=[
                pl.BlockSpec((None, C, lp), lambda b: (b, 0, 0)),
                pl.BlockSpec((9, 4, C), lambda b: (0, 0, 0)),
                pl.BlockSpec((4, 1), lambda b: (0, 0)),
            ],
            out_specs=pl.BlockSpec((None, 4, mo), lambda b: (b, 0, 0)),
            scratch_shapes=[pltpu.VMEM((4, mo), jnp.float32)],
        ),
        compiler_params=pltpu.CompilerParams(
            dimension_semantics=("parallel",),
            vmem_limit_bytes=_VMEM_LIMIT),
    )(xt, wmat_t, shift_col)

    # out[b, 2p+q, i*S+j] -> img[b, 2i+p, 2j+q]  (drop garbage cols j >= W)
    y = out.reshape(B, 2, 2, H, S)
    y = jnp.transpose(y, (0, 3, 1, 4, 2))[:, :, :, :W, :]
    return y.reshape(B, 2 * H, 2 * W)


# ----------------------------------------------------------------------------
# Parameters (deterministic synthetic init), one-time repack, forward pass.
# ----------------------------------------------------------------------------
def init_generator_params(key):
    def nrm(k, shape, scale):
        return scale * jax.random.normal(k, shape, jnp.float32)

    ks = iter(jax.random.split(key, 32))
    params = {
        "fc_w": nrm(next(ks), (100, 8 * 8 * 1024), 1.0 / np.sqrt(100.0)),
        "fc_b": nrm(next(ks), (8 * 8 * 1024,), 0.02),
        "convs": [],
    }
    chans = [1024, 512, 256, 128, 64, 1]
    for li in range(5):
        cin, cout = chans[li], chans[li + 1]
        layer = {"w": nrm(next(ks), (cin, cout, 6, 6), 1.0 / np.sqrt(cin * 36.0))}
        if li < 4:   # BatchNorm2d layers (conv bias=False)
            layer["gamma"] = 1.0 + nrm(next(ks), (cout,), 0.1)
            layer["beta"] = nrm(next(ks), (cout,), 0.1)
            layer["mean"] = nrm(next(ks), (cout,), 0.1)
            layer["var"] = 1.0 + 0.1 * jnp.abs(
                jax.random.normal(next(ks), (cout,), jnp.float32))
        else:        # final conv has bias=True, followed by Tanh
            layer["bias"] = nrm(next(ks), (cout,), 0.1)
        params["convs"].append(layer)
    return params


def prepare_params(params):
    """One-time repack (hoisted out of forward): bf16 phase weight matrices
    with folded inference-mode BN scale, FC columns permuted so the FC output
    is directly NHWC-flat, transposed phase matrix for the Cout=1 layer."""
    eps = 1e-5
    c = np.arange(1024)
    hw = np.arange(8)
    hh, ww, cc = np.meshgrid(hw, hw, c, indexing="ij")
    perm = (cc * 64 + hh * 8 + ww).reshape(-1)       # new (h,w,c) <- old (c,h,w)
    packed = {
        "fc_w": params["fc_w"][:, perm].astype(jnp.bfloat16),
        "fc_b": params["fc_b"][perm].astype(jnp.float32).reshape(1, -1),
        "convs": [],
    }
    for li, layer in enumerate(params["convs"]):
        cout = layer["w"].shape[1]
        if li < 4:   # folded BatchNorm (inference mode)
            scale = layer["gamma"] / jnp.sqrt(layer["var"] + eps)
            shift = layer["beta"] - layer["mean"] * scale
            packed["convs"].append({
                "w": pack_conv_weight(layer["w"], scale_co=scale),
                "shift": jnp.tile(shift, 4).reshape(1, 4 * cout).astype(jnp.float32),
            })
        else:        # final conv: bias only, transposed phase matrix
            shift = layer["bias"]
            packed["convs"].append({
                "w": pack_conv_weight(layer["w"], transpose_out=True),
                "shift": jnp.tile(shift, 4).reshape(4, 1).astype(jnp.float32),
            })
    return packed


def generator_forward(packed, noise):
    B = noise.shape[0]
    h = fc_forward(noise, packed["fc_w"], packed["fc_b"])   # (B, 65536) bf16
    h = h.reshape(B, 8, 8, 1024)                            # NHWC (cols pre-permuted)
    for li in range(4):
        layer = packed["convs"][li]
        h = conv_transpose_s2k6p2(h, layer["w"], layer["shift"], "leaky",
                                  tn=_LAYER_TN[li], out_dtype=jnp.bfloat16)
    last = packed["convs"][4]
    img = conv_transpose_s2k6p2_cout1(h, last["w"], last["shift"], "tanh")
    return img[:, None, :, :]                               # NCHW (B, 1, 256, 256)


# ----------------------------------------------------------------------------
# Pure-XLA references (building block + end-to-end, bf16-matched).
# ----------------------------------------------------------------------------
def _ref_conv_transpose(x_nhwc, w_iohw):
    w_hwio = jnp.transpose(w_iohw[:, :, ::-1, ::-1], (2, 3, 0, 1))
    return jax.lax.conv_general_dilated(
        x_nhwc, w_hwio, window_strides=(1, 1),
        padding=((3, 3), (3, 3)), lhs_dilation=(2, 2),
        dimension_numbers=("NHWC", "HWIO", "NHWC"),
        preferred_element_type=jnp.float32)


def reference_forward(params, noise):
    eps = 1e-5
    B = noise.shape[0]
    h = jnp.dot(noise.astype(jnp.bfloat16), params["fc_w"].astype(jnp.bfloat16),
                preferred_element_type=jnp.float32)
    h = (h + params["fc_b"]).astype(jnp.bfloat16)
    h = jnp.transpose(h.reshape(B, 1024, 8, 8), (0, 2, 3, 1))   # NHWC
    for li, layer in enumerate(params["convs"]):
        if li < 4:
            scale = layer["gamma"] / jnp.sqrt(layer["var"] + eps)
            shift = layer["beta"] - layer["mean"] * scale
        else:
            scale = jnp.ones((layer["w"].shape[1],), jnp.float32)
            shift = layer["bias"]
        w_eff = (layer["w"] * scale[None, :, None, None]).astype(jnp.bfloat16)
        y = _ref_conv_transpose(h, w_eff) + shift
        if li < 4:
            h = jnp.where(y >= 0.0, y, 0.2 * y).astype(jnp.bfloat16)
        else:
            h = jnp.tanh(y)
    return jnp.transpose(h, (0, 3, 1, 2))                        # NCHW


if __name__ == "__main__":
    root = jax.random.PRNGKey(0)

    # --- small-shape building-block checks ----------------------------------
    xs = jax.random.normal(jax.random.fold_in(root, 3), (2, 5, 5, 8), jnp.float32)
    ws = 0.1 * jax.random.normal(jax.random.fold_in(root, 4), (8, 4, 6, 6),
                                 jnp.float32)
    got = conv_transpose_s2k6p2(
        xs, pack_conv_weight(ws), jnp.zeros((1, 16), jnp.float32), "none",
        tn=16, out_dtype=jnp.float32)
    want = _ref_conv_transpose(xs.astype(jnp.bfloat16), ws.astype(jnp.bfloat16))
    np.testing.assert_allclose(np.asarray(got), np.asarray(want),
                               rtol=2e-2, atol=2e-2)

    ws1 = 0.1 * jax.random.normal(jax.random.fold_in(root, 5), (8, 1, 6, 6),
                                  jnp.float32)
    got1 = conv_transpose_s2k6p2_cout1(
        xs, pack_conv_weight(ws1, transpose_out=True),
        jnp.zeros((4, 1), jnp.float32), "none")
    want1 = _ref_conv_transpose(xs.astype(jnp.bfloat16),
                                ws1.astype(jnp.bfloat16))[..., 0]
    np.testing.assert_allclose(np.asarray(got1), np.asarray(want1),
                               rtol=2e-2, atol=2e-2)

    # --- full generator: noise (2, 100) -> (2, 1, 256, 256) -----------------
    params = init_generator_params(jax.random.fold_in(root, 1))
    packed = jax.block_until_ready(jax.jit(prepare_params)(params))
    noise = jax.random.normal(jax.random.fold_in(root, 2), (2, 100), jnp.float32)

    out = jax.block_until_ready(jax.jit(generator_forward)(packed, noise))
    assert out.shape == (2, 1, 256, 256), out.shape
    assert out.dtype == jnp.float32
    assert bool(jnp.all(jnp.isfinite(out)))

    # End-to-end check against a bf16-matched XLA reference forward.
    ref = jax.block_until_ready(jax.jit(reference_forward)(params, noise))
    np.testing.assert_allclose(np.asarray(out), np.asarray(ref),
                               rtol=5e-2, atol=5e-2)

    print("KERNEL_OK")
</pallas_src>

<mosaic_0001>
module attributes {stable_mosaic.version = 11 : i64} {
  func.func @_conv_kernel(%arg0: i32, %arg1: i32, %arg2: memref<1x56x8xbf16, #tpu.memory_space<vmem>>, %arg3: memref<9x8x16xbf16, #tpu.memory_space<vmem>>, %arg4: memref<1x16xf32, #tpu.memory_space<vmem>>, %arg5: memref<1x40x16xf32, #tpu.memory_space<vmem>>, %arg6: memref<40x16xf32, #tpu.memory_space<vmem>>) attributes {dimension_semantics = [#tpu.dimension_semantics<parallel>, #tpu.dimension_semantics<parallel>], iteration_bounds = array<i64: 1, 2>, scalar_prefetch = 0 : i64, scratch_operands = 1 : i64, tpu.core_type = #tpu.core_type<tc>, window_params = [{transform_indices = @transform_0, window_bounds = array<i64: 1, 56, 8>}, {transform_indices = @transform_1, window_bounds = array<i64: 9, 8, 16>}, {transform_indices = @transform_2, window_bounds = array<i64: 1, 16>}, {transform_indices = @transform_3, window_bounds = array<i64: 1, 40, 16>}]} {
    %c0 = arith.constant 0 : index
    %c0_0 = arith.constant 0 : index
    %c0_1 = arith.constant 0 : index
    %0 = vector.load %arg2[%c0, %c0_0, %c0_1] : memref<1x56x8xbf16, #tpu.memory_space<vmem>>, vector<1x40x8xbf16>
    %1 = vector.shape_cast %0 : vector<1x40x8xbf16> to vector<40x8xbf16>
    %c0_2 = arith.constant 0 : index
    %c0_3 = arith.constant 0 : index
    %c0_4 = arith.constant 0 : index
    %2 = vector.load %arg3[%c0_2, %c0_3, %c0_4] : memref<9x8x16xbf16, #tpu.memory_space<vmem>>, vector<1x8x16xbf16>
    %3 = vector.shape_cast %2 : vector<1x8x16xbf16> to vector<8x16xbf16>
    %cst = arith.constant dense<0.000000e+00> : vector<40x16xf32>
    %4 = tpu.matmul %1, %3, %cst {dimension_numbers = #tpu.dot_dimension_numbers<[1], [0], [0], [1], [0, 0, 1, 1], [], []>} : vector<40x8xbf16>, vector<8x16xbf16>, vector<40x16xf32> -> vector<40x16xf32>
    %c0_5 = arith.constant 0 : index
    %c0_6 = arith.constant 0 : index
    %5 = vector.load %arg6[%c0_5, %c0_6] : memref<40x16xf32, #tpu.memory_space<vmem>>, vector<40x16xf32>
    tpu.vector_store %arg6[%c0_5, %c0_6], %4 {strides = array<i32>} : memref<40x16xf32, #tpu.memory_space<vmem>>, vector<40x16xf32>,
    %c0_7 = arith.constant 0 : index
    %c0_8 = arith.constant 0 : index
    %6 = vector.load %arg6[%c0_7, %c0_8] : memref<40x16xf32, #tpu.memory_space<vmem>>, vector<40x16xf32>
    %c0_9 = arith.constant 0 : index
    %c1 = arith.constant 1 : index
    %c0_10 = arith.constant 0 : index
    %7 = vector.load %arg2[%c0_9, %c1, %c0_10] : memref<1x56x8xbf16, #tpu.memory_space<vmem>>, vector<1x40x8xbf16>
    %8 = vector.shape_cast %7 : vector<1x40x8xbf16> to vector<40x8xbf16>
    %c1_11 = arith.constant 1 : index
    %c0_12 = arith.constant 0 : index
    %c0_13 = arith.constant 0 : index
    %9 = vector.load %arg3[%c1_11, %c0_12, %c0_13] : memref<9x8x16xbf16, #tpu.memory_space<vmem>>, vector<1x8x16xbf16>
    %10 = vector.shape_cast %9 : vector<1x8x16xbf16> to vector<8x16xbf16>
    %cst_14 = arith.constant dense<0.000000e+00> : vector<40x16xf32>
    %11 = tpu.matmul %8, %10, %cst_14 {dimension_numbers = #tpu.dot_dimension_numbers<[1], [0], [0], [1], [0, 0, 1, 1], [], []>} : vector<40x8xbf16>, vector<8x16xbf16>, vector<40x16xf32> -> vector<40x16xf32>
    %12 = arith.addf %6, %11 : vector<40x16xf32>
    %c0_15 = arith.constant 0 : index
    %c0_16 = arith.constant 0 : index
    %13 = vector.load %arg6[%c0_15, %c0_16] : memref<40x16xf32, #tpu.memory_space<vmem>>, vector<40x16xf32>
    tpu.vector_store %arg6[%c0_15, %c0_16], %12 {strides = array<i32>} : memref<40x16xf32, #tpu.memory_space<vmem>>, vector<40x16xf32>,
    %c0_17 = arith.constant 0 : index
    %c0_18 = arith.constant 0 : index
    %14 = vector.load %arg6[%c0_17, %c0_18] : memref<40x16xf32, #tpu.memory_space<vmem>>, vector<40x16xf32>
    %c0_19 = arith.constant 0 : index
    %c2 = arith.constant 2 : index
    %c0_20 = arith.constant 0 : index
    %15 = vector.load %arg2[%c0_19, %c2, %c0_20] : memref<1x56x8xbf16, #tpu.memory_space<vmem>>, vector<1x40x8xbf16>
    %16 = vector.shape_cast %15 : vector<1x40x8xbf16> to vector<40x8xbf16>
    %c2_21 = arith.constant 2 : index
    %c0_22 = arith.constant 0 : index
    %c0_23 = arith.constant 0 : index
    %17 = vector.load %arg3[%c2_21, %c0_22, %c0_23] : memref<9x8x16xbf16, #tpu.memory_space<vmem>>, vector<1x8x16xbf16>
    %18 = vector.shape_cast %17 : vector<1x8x16xbf16> to vector<8x16xbf16>
    %cst_24 = arith.constant dense<0.000000e+00> : vector<40x16xf32>
    %19 = tpu.matmul %16, %18, %cst_24 {dimension_numbers = #tpu.dot_dimension_numbers<[1], [0], [0], [1], [0, 0, 1, 1], [], []>} : vector<40x8xbf16>, vector<8x16xbf16>, vector<40x16xf32> -> vector<40x16xf32>
    %20 = arith.addf %14, %19 : vector<40x16xf32>
    %c0_25 = arith.constant 0 : index
    %c0_26 = arith.constant 0 : index
    %21 = vector.load %arg6[%c0_25, %c0_26] : memref<40x16xf32, #tpu.memory_space<vmem>>, vector<40x16xf32>
    tpu.vector_store %arg6[%c0_25, %c0_26], %20 {strides = array<i32>} : memref<40x16xf32, #tpu.memory_space<vmem>>, vector<40x16xf32>,
    %c0_27 = arith.constant 0 : index
    %c0_28 = arith.constant 0 : index
    %22 = vector.load %arg6[%c0_27, %c0_28] : memref<40x16xf32, #tpu.memory_space<vmem>>, vector<40x16xf32>
    %c0_29 = arith.constant 0 : index
    %c7 = arith.constant 7 : index
    %c0_30 = arith.constant 0 : index
    %23 = vector.load %arg2[%c0_29, %c7, %c0_30] : memref<1x56x8xbf16, #tpu.memory_space<vmem>>, vector<1x40x8xbf16>
    %24 = vector.shape_cast %23 : vector<1x40x8xbf16> to vector<40x8xbf16>
    %c3 = arith.constant 3 : index
    %c0_31 = arith.constant 0 : index
    %c0_32 = arith.constant 0 : index
    %25 = vector.load %arg3[%c3, %c0_31, %c0_32] : memref<9x8x16xbf16, #tpu.memory_space<vmem>>, vector<1x8x16xbf16>
    %26 = vector.shape_cast %25 : vector<1x8x16xbf16> to vector<8x16xbf16>
    %cst_33 = arith.constant dense<0.000000e+00> : vector<40x16xf32>
    %27 = tpu.matmul %24, %26, %cst_33 {dimension_numbers = #tpu.dot_dimension_numbers<[1], [0], [0], [1], [0, 0, 1, 1], [], []>} : vector<40x8xbf16>, vector<8x16xbf16>, vector<40x16xf32> -> vector<40x16xf32>
    %28 = arith.addf %22, %27 : vector<40x16xf32>
    %c0_34 = arith.constant 0 : index
    %c0_35 = arith.constant 0 : index
    %29 = vector.load %arg6[%c0_34, %c0_35] : memref<40x16xf32, #tpu.memory_space<vmem>>, vector<40x16xf32>
    tpu.vector_store %arg6[%c0_34, %c0_35], %28 {strides = array<i32>} : memref<40x16xf32, #tpu.memory_space<vmem>>, vector<40x16xf32>,
    %c0_36 = arith.constant 0 : index
    %c0_37 = arith.constant 0 : index
    %30 = vector.load %arg6[%c0_36, %c0_37] : memref<40x16xf32, #tpu.memory_space<vmem>>, vector<40x16xf32>
    %c0_38 = arith.constant 0 : index
    %c8 = arith.constant 8 : index
    %c0_39 = arith.constant 0 : index
    %31 = vector.load %arg2[%c0_38, %c8, %c0_39] : memref<1x56x8xbf16, #tpu.memory_space<vmem>>, vector<1x40x8xbf16>
    %32 = vector.shape_cast %31 : vector<1x40x8xbf16> to vector<40x8xbf16>
    %c4 = arith.constant 4 : index
    %c0_40 = arith.constant 0 : index
    %c0_41 = arith.constant 0 : index
    %33 = vector.load %arg3[%c4, %c0_40, %c0_41] : memref<9x8x16xbf16, #tpu.memory_space<vmem>>, vector<1x8x16xbf16>
    %34 = vector.shape_cast %33 : vector<1x8x16xbf16> to vector<8x16xbf16>
    %cst_42 = arith.constant dense<0.000000e+00> : vector<40x16xf32>
    %35 = tpu.matmul %32, %34, %cst_42 {dimension_numbers = #tpu.dot_dimension_numbers<[1], [0], [0], [1], [0, 0, 1, 1], [], []>} : vector<40x8xbf16>, vector<8x16xbf16>, vector<40x16xf32> -> vector<40x16xf32>
    %36 = arith.addf %30, %35 : vector<40x16xf32>
    %c0_43 = arith.constant 0 : index
    %c0_44 = arith.constant 0 : index
    %37 = vector.load %arg6[%c0_43, %c0_44] : memref<40x16xf32, #tpu.memory_space<vmem>>, vector<40x16xf32>
    tpu.vector_store %arg6[%c0_43, %c0_44], %36 {strides = array<i32>} : memref<40x16xf32, #tpu.memory_space<vmem>>, vector<40x16xf32>,
    %c0_45 = arith.constant 0 : index
    %c0_46 = arith.constant 0 : index
    %38 = vector.load %arg6[%c0_45, %c0_46] : memref<40x16xf32, #tpu.memory_space<vmem>>, vector<40x16xf32>
    %c0_47 = arith.constant 0 : index
    %c9 = arith.constant 9 : index
    %c0_48 = arith.constant 0 : index
    %39 = vector.load %arg2[%c0_47, %c9, %c0_48] : memref<1x56x8xbf16, #tpu.memory_space<vmem>>, vector<1x40x8xbf16>
    %40 = vector.shape_cast %39 : vector<1x40x8xbf16> to vector<40x8xbf16>
    %c5 = arith.constant 5 : index
    %c0_49 = arith.constant 0 : index
    %c0_50 = arith.constant 0 : index
    %41 = vector.load %arg3[%c5, %c0_49, %c0_50] : memref<9x8x16xbf16, #tpu.memory_space<vmem>>, vector<1x8x16xbf16>
    %42 = vector.shape_cast %41 : vector<1x8x16xbf16> to vector<8x16xbf16>
    %cst_51 = arith.constant dense<0.000000e+00> : vector<40x16xf32>
    %43 = tpu.matmul %40, %42, %cst_51 {dimension_numbers = #tpu.dot_dimension_numbers<[1], [0], [0], [1], [0, 0, 1, 1], [], []>} : vector<40x8xbf16>, vector<8x16xbf16>, vector<40x16xf32> -> vector<40x16xf32>
    %44 = arith.addf %38, %43 : vector<40x16xf32>
    %c0_52 = arith.constant 0 : index
    %c0_53 = arith.constant 0 : index
    %45 = vector.load %arg6[%c0_52, %c0_53] : memref<40x16xf32, #tpu.memory_space<vmem>>, vector<40x16xf32>
    tpu.vector_store %arg6[%c0_52, %c0_53], %44 {strides = array<i32>} : memref<40x16xf32, #tpu.memory_space<vmem>>, vector<40x16xf32>,
    %c0_54 = arith.constant 0 : index
    %c0_55 = arith.constant 0 : index
    %46 = vector.load %arg6[%c0_54, %c0_55] : memref<40x16xf32, #tpu.memory_space<vmem>>, vector<40x16xf32>
    %c0_56 = arith.constant 0 : index
    %c14 = arith.constant 14 : index
    %c0_57 = arith.constant 0 : index
    %47 = vector.load %arg2[%c0_56, %c14, %c0_57] : memref<1x56x8xbf16, #tpu.memory_space<vmem>>, vector<1x40x8xbf16>
    %48 = vector.shape_cast %47 : vector<1x40x8xbf16> to vector<40x8xbf16>
    %c6 = arith.constant 6 : index
    %c0_58 = arith.constant 0 : index
    %c0_59 = arith.constant 0 : index
    %49 = vector.load %arg3[%c6, %c0_58, %c0_59] : memref<9x8x16xbf16, #tpu.memory_space<vmem>>, vector<1x8x16xbf16>
    %50 = vector.shape_cast %49 : vector<1x8x16xbf16> to vector<8x16xbf16>
    %cst_60 = arith.constant dense<0.000000e+00> : vector<40x16xf32>
    %51 = tpu.matmul %48, %50, %cst_60 {dimension_numbers = #tpu.dot_dimension_numbers<[1], [0], [0], [1], [0, 0, 1, 1], [], []>} : vector<40x8xbf16>, vector<8x16xbf16>, vector<40x16xf32> -> vector<40x16xf32>
    %52 = arith.addf %46, %51 : vector<40x16xf32>
    %c0_61 = arith.constant 0 : index
    %c0_62 = arith.constant 0 : index
    %53 = vector.load %arg6[%c0_61, %c0_62] : memref<40x16xf32, #tpu.memory_space<vmem>>, vector<40x16xf32>
    tpu.vector_store %arg6[%c0_61, %c0_62], %52 {strides = array<i32>} : memref<40x16xf32, #tpu.memory_space<vmem>>, vector<40x16xf32>,
    %c0_63 = arith.constant 0 : index
    %c0_64 = arith.constant 0 : index
    %54 = vector.load %arg6[%c0_63, %c0_64] : memref<40x16xf32, #tpu.memory_space<vmem>>, vector<40x16xf32>
    %c0_65 = arith.constant 0 : index
    %c15 = arith.constant 15 : index
    %c0_66 = arith.constant 0 : index
    %55 = vector.load %arg2[%c0_65, %c15, %c0_66] : memref<1x56x8xbf16, #tpu.memory_space<vmem>>, vector<1x40x8xbf16>
    %56 = vector.shape_cast %55 : vector<1x40x8xbf16> to vector<40x8xbf16>
    %c7_67 = arith.constant 7 : index
    %c0_68 = arith.constant 0 : index
    %c0_69 = arith.constant 0 : index
    %57 = vector.load %arg3[%c7_67, %c0_68, %c0_69] : memref<9x8x16xbf16, #tpu.memory_space<vmem>>, vector<1x8x16xbf16>
    %58 = vector.shape_cast %57 : vector<1x8x16xbf16> to vector<8x16xbf16>
    %cst_70 = arith.constant dense<0.000000e+00> : vector<40x16xf32>
    %59 = tpu.matmul %56, %58, %cst_70 {dimension_numbers = #tpu.dot_dimension_numbers<[1], [0], [0], [1], [0, 0, 1, 1], [], []>} : vector<40x8xbf16>, vector<8x16xbf16>, vector<40x16xf32> -> vector<40x16xf32>
    %60 = arith.addf %54, %59 : vector<40x16xf32>
    %c0_71 = arith.constant 0 : index
    %c0_72 = arith.constant 0 : index
    %61 = vector.load %arg6[%c0_71, %c0_72] : memref<40x16xf32, #tpu.memory_space<vmem>>, vector<40x16xf32>
    tpu.vector_store %arg6[%c0_71, %c0_72], %60 {strides = array<i32>} : memref<40x16xf32, #tpu.memory_space<vmem>>, vector<40x16xf32>,
    %c0_73 = arith.constant 0 : index
    %c0_74 = arith.constant 0 : index
    %62 = vector.load %arg6[%c0_73, %c0_74] : memref<40x16xf32, #tpu.memory_space<vmem>>, vector<40x16xf32>
    %c0_75 = arith.constant 0 : index
    %c16 = arith.constant 16 : index
    %c0_76 = arith.constant 0 : index
    %63 = vector.load %arg2[%c0_75, %c16, %c0_76] : memref<1x56x8xbf16, #tpu.memory_space<vmem>>, vector<1x40x8xbf16>
    %64 = vector.shape_cast %63 : vector<1x40x8xbf16> to vector<40x8xbf16>
    %c8_77 = arith.constant 8 : index
    %c0_78 = arith.constant 0 : index
    %c0_79 = arith.constant 0 : index
    %65 = vector.load %arg3[%c8_77, %c0_78, %c0_79] : memref<9x8x16xbf16, #tpu.memory_space<vmem>>, vector<1x8x16xbf16>
    %66 = vector.shape_cast %65 : vector<1x8x16xbf16> to vector<8x16xbf16>
    %cst_80 = arith.constant dense<0.000000e+00> : vector<40x16xf32>
    %67 = tpu.matmul %64, %66, %cst_80 {dimension_numbers = #tpu.dot_dimension_numbers<[1], [0], [0], [1], [0, 0, 1, 1], [], []>} : vector<40x8xbf16>, vector<8x16xbf16>, vector<40x16xf32> -> vector<40x16xf32>
    %68 = arith.addf %62, %67 : vector<40x16xf32>
    %c0_81 = arith.constant 0 : index
    %c0_82 = arith.constant 0 : index
    %69 = vector.load %arg6[%c0_81, %c0_82] : memref<40x16xf32, #tpu.memory_space<vmem>>, vector<40x16xf32>
    tpu.vector_store %arg6[%c0_81, %c0_82], %68 {strides = array<i32>} : memref<40x16xf32, #tpu.memory_space<vmem>>, vector<40x16xf32>,
    %c0_83 = arith.constant 0 : index
    %c0_84 = arith.constant 0 : index
    %70 = vector.load %arg6[%c0_83, %c0_84] : memref<40x16xf32, #tpu.memory_space<vmem>>, vector<40x16xf32>
    %c0_85 = arith.constant 0 : index
    %c0_86 = arith.constant 0 : index
    %71 = vector.load %arg4[%c0_85, %c0_86] : memref<1x16xf32, #tpu.memory_space<vmem>>, vector<1x16xf32>
    %72 = vector.broadcast %71 : vector<1x16xf32> to vector<40x16xf32>
    %73 = arith.addf %70, %72 : vector<40x16xf32>
    %c0_87 = arith.constant 0 : index
    %c0_88 = arith.constant 0 : index
    %c0_89 = arith.constant 0 : index
    %74 = vector.load %arg5[%c0_87, %c0_88, %c0_89] : memref<1x40x16xf32, #tpu.memory_space<vmem>>, vector<1x40x16xf32>
    %75 = vector.shape_cast %74 : vector<1x40x16xf32> to vector<40x16xf32>
    %76 = vector.shape_cast %73 : vector<40x16xf32> to vector<1x40x16xf32>
    tpu.vector_store %arg5[%c0_87, %c0_88, %c0_89], %76 {strides = array<i32>} : memref<1x40x16xf32, #tpu.memory_space<vmem>>, vector<1x40x16xf32>,
    return
  }
  func.func @transform_0(%arg0: i32, %arg1: i32) -> (i32, i32, i32) {
    %c0_i32 = arith.constant 0 : i32
    %c0_i32_0 = arith.constant 0 : i32
    %c0_i32_1 = arith.constant 0 : i32
    return %arg1, %c0_i32, %c0_i32_0 : i32, i32, i32
  }
  func.func @transform_1(%arg0: i32, %arg1: i32) -> (i32, i32, i32) {
    %c0_i32 = arith.constant 0 : i32
    %c0_i32_0 = arith.constant 0 : i32
    %c0_i32_1 = arith.constant 0 : i32
    return %c0_i32, %c0_i32_0, %arg0 : i32, i32, i32
  }
  func.func @transform_2(%arg0: i32, %arg1: i32) -> (i32, i32) {
    %c0_i32 = arith.constant 0 : i32
    %c0_i32_0 = arith.constant 0 : i32
    return %c0_i32, %arg0 : i32, i32
  }
  func.func @transform_3(%arg0: i32, %arg1: i32) -> (i32, i32, i32) {
    %c0_i32 = arith.constant 0 : i32
    %c0_i32_0 = arith.constant 0 : i32
    return %arg1, %c0_i32, %arg0 : i32, i32, i32
  }
}

</mosaic_0001>

<llo_original>
// kernel: tpu_custom_call.1
$region0: #{tpu_custom_call.1}
  #allocation0 [shape = 'u32[]', space=smem, size = 0x4, offset = 0x4, fixed_abs, tag = 'smem constant byte address 0x4 - core index']
  #allocation1 [shape = 'u32[144,128]{1,0:T(1,128)}', space=vmem, size = 0x12000, scoped, tag = 'internal scratch']
  #allocation2 [shape = 'f32[40,16]{1,0:T(8,128)}', space=vmem, size = 0x5000, scoped, tag = 'scratch operand']
  %s0 = inlined_call_operand.vmem [shape: bf16[2,56,8], index: 0, kind: input, shape index: {}]
  %s1 = inlined_call_operand.vmem [shape: bf16[9,8,16], index: 1, kind: input, shape index: {}]
  %s2 = inlined_call_operand.vmem [shape: f32[1,16], index: 2, kind: input, shape index: {}]
  %s3 = inlined_call_operand.vmem [shape: f32[2,40,16], index: 3, kind: output, shape index: {}]
  %s4 = sld [smem:[#allocation0]]
  $region45: #{tpu_custom_call.1} parent=0
    _
  %s6 = ssub.s32 1, %s4
  %s7 = scalar_select 0, %s6, %s4
  loop: start=0, step=1, limit=4
  $region2: #{tpu_custom_call.1} parent=0 // loop_pre_header
    _
  $region3: #{tpu_custom_call.1} parent=0 // loop_header
    %s9 = sphi 0, %s13
    %p10 = scmp.ge.s32.totalorder %s9, 4
    %s16 = sphi 0, %s28
    %s17 = sphi 0, %s24
    %s18 = sphi 0, %s16
    %s19 = sphi 0, %s17
    %s20 = sphi 0, %s18
    %s21 = sphi 0, %s19
    %s31 = sphi 0, %s33
    %s34 = sphi 0, %s31
    %s35 = sphi 0, %s34
    %s51 = sphi 0, %s35
    %s57 = sphi 0, %s59
    %s60 = sphi 0, %s57
    %s61 = sphi 0, %s60
    %s77 = sphi 0, %s61
    %s83 = sphi 0, %s85
    %s86 = sphi 0, %s83
    %s87 = sphi 0, %s86
    %s103 = sphi 0, %s87
    %s111 = sphi 0, %s113
    %s114 = sphi 0, %s111
    %s115 = sphi 0, %s114
    %s131 = sphi 0, %s115
  $region4: #{tpu_custom_call.1} parent=0 // loop_header_branch
    %12 = sbr.rel (%p10) target = $region8
  $region5: #{tpu_custom_call.1} parent=0 // loop_body
    %s14 = ssub.s32 %s9, 1
    %s15 = ssub.s32 %s9, 2
    %s22 = sadd.s32 1, %s17
    %p23 = scmp.ge.s32.totalorder %s22, 2
    %s24 = scalar_select %p23, 0, %s22
    %s25 = sadd.s32 1, %s16
    %s26 = scalar_select %p23, %s25, %s16
    %p27 = scmp.ge.s32.totalorder %s26, 1
    %s28 = scalar_select %p27, 0, %s26
    %s29 = ssub.s32 %s17, %s24
    %p30 = scmp.eq.s32.totalorder %s29, 0
    %s32 = sadd.s32 %s31, 1
    %s33 = scalar_select %p30, %s31, %s32
    %p36 = pneg %p30
    %p37 = scmp.eq.s32.totalorder %s9, 1
    %p38 = por %p36, %p37
    %p39 = scmp.ne.s32.totalorder %s31, %s34
    %p40 = scmp.eq.s32.totalorder %s9, 0
    %p41 = por %p39, %p40
    %p42 = scmp.ne.s32.totalorder %s31, %s34
    %p43 = scmp.eq.s32.totalorder %s14, 1
    %p44 = por %p42, %p43
    %p45 = scmp.ne.s32.totalorder %s34, %s35
    %p46 = scmp.eq.s32.totalorder %s14, 0
    %p47 = por %p45, %p46
    %p48 = scmp.ne.s32.totalorder %s34, %s35
    %p49 = scmp.eq.s32.totalorder %s15, 1
    %p50 = por %p48, %p49
    %p52 = scmp.ne.s32.totalorder %s35, %s51
    %p53 = scmp.eq.s32.totalorder %s15, 0
    %p54 = por %p52, %p53
    %s55 = ssub.s32 %s16, %s28
    %p56 = scmp.eq.s32.totalorder %s55, 0
    %s58 = sadd.s32 %s57, 1
    %s59 = scalar_select %p56, %s57, %s58
    %p62 = pneg %p56
    %p63 = scmp.eq.s32.totalorder %s9, 1
    %p64 = por %p62, %p63
    %p65 = scmp.ne.s32.totalorder %s57, %s60
    %p66 = scmp.eq.s32.totalorder %s9, 0
    %p67 = por %p65, %p66
    %p68 = scmp.ne.s32.totalorder %s57, %s60
    %p69 = scmp.eq.s32.totalorder %s14, 1
    %p70 = por %p68, %p69
    %p71 = scmp.ne.s32.totalorder %s60, %s61
    %p72 = scmp.eq.s32.totalorder %s14, 0
    %p73 = por %p71, %p72
    %p74 = scmp.ne.s32.totalorder %s60, %s61
    %p75 = scmp.eq.s32.totalorder %s15, 1
    %p76 = por %p74, %p75
    %p78 = scmp.ne.s32.totalorder %s61, %s77
    %p79 = scmp.eq.s32.totalorder %s15, 0
    %p80 = por %p78, %p79
    %s81 = ssub.s32 %s16, %s28
    %p82 = scmp.eq.s32.totalorder %s81, 0
    %s84 = sadd.s32 %s83, 1
    %s85 = scalar_select %p82, %s83, %s84
    %p88 = pneg %p82
    %p89 = scmp.eq.s32.totalorder %s9, 1
    %p90 = por %p88, %p89
    %p91 = scmp.ne.s32.totalorder %s83, %s86
    %p92 = scmp.eq.s32.totalorder %s9, 0
    %p93 = por %p91, %p92
    %p94 = scmp.ne.s32.totalorder %s83, %s86
    %p95 = scmp.eq.s32.totalorder %s14, 1
    %p96 = por %p94, %p95
    %p97 = scmp.ne.s32.totalorder %s86, %s87
    %p98 = scmp.eq.s32.totalorder %s14, 0
    %p99 = por %p97, %p98
    %p100 = scmp.ne.s32.totalorder %s86, %s87
    %p101 = scmp.eq.s32.totalorder %s15, 1
    %p102 = por %p100, %p101
    %p104 = scmp.ne.s32.totalorder %s87, %s103
    %p105 = scmp.eq.s32.totalorder %s15, 0
    %p106 = por %p104, %p105
    %s107 = ssub.s32 %s17, %s24
    %s108 = ssub.s32 %s16, %s28
    %s109 = sor.u32 %s107, %s108
    %p110 = scmp.eq.s32.totalorder %s109, 0
    %s112 = sadd.s32 %s111, 1
    %s113 = scalar_select %p110, %s111, %s112
    %p116 = pneg %p110
    %p117 = scmp.eq.s32.totalorder %s9, 1
    %p118 = por %p116, %p117
    %p119 = scmp.ne.s32.totalorder %s111, %s114
    %p120 = scmp.eq.s32.totalorder %s9, 0
    %p121 = por %p119, %p120
    %p122 = scmp.ne.s32.totalorder %s111, %s114
    %p123 = scmp.eq.s32.totalorder %s14, 1
    %p124 = por %p122, %p123
    %p125 = scmp.ne.s32.totalorder %s114, %s115
    %p126 = scmp.eq.s32.totalorder %s14, 0
    %p127 = por %p125, %p126
    %p128 = scmp.ne.s32.totalorder %s114, %s115
    %p129 = scmp.eq.s32.totalorder %s15, 1
    %p130 = por %p128, %p129
    %p132 = scmp.ne.s32.totalorder %s115, %s131
    %p133 = scmp.eq.s32.totalorder %s15, 0
    %p134 = por %p132, %p133
    %p135 = scmp.le.s32.totalorder 1, %s9
    %p136 = scmp.lt.s32.totalorder %s9, 3
    %p137 = pnand %p135, %p136
    %p138 = pneg %p137
    // Predicated region
    $region9: #{tpu_custom_call.1} parent=5 // pred_check
      _
    $region10: #{tpu_custom_call.1} parent=5 // pred_check_branch
      %140 = sbr.rel (%p137) target = $region12
    $region11: #{tpu_custom_call.1} parent=5 // pred_region
      %s141 = ssub.s32 %s9, 1
      // Predicated region
      $region13: #{tpu_custom_call.1} parent=11 // pred_check
        %p142 = pneg %p73
      $region14: #{tpu_custom_call.1} parent=11 // pred_check_branch
        %144 = sbr.rel (%p142) target = $region16
      $region15: #{tpu_custom_call.1} parent=11 // pred_region
        %p145 = scmp.lt.s32.totalorder %s18, 0
        %s146 = scalar_select %p145, %s18, 0
        %s147 = smul.addr %s146, 4
        %s148 = scalar_lea.vmem %s1, %s147
      $region16: #{tpu_custom_call.1} parent=11 // pred_fallthru
        _
      // Predicated region
      $region17: #{tpu_custom_call.1} parent=11 // pred_check
        %p149 = pneg %p99
      $region18: #{tpu_custom_call.1} parent=11 // pred_check_branch
        %151 = sbr.rel (%p149) target = $region20
      $region19: #{tpu_custom_call.1} parent=11 // pred_region
        %p152 = scmp.lt.s32.totalorder %s18, 0
        %s153 = scalar_select %p152, %s18, 0
        %s154 = scalar_lea.vmem %s2, %s153
      $region20: #{tpu_custom_call.1} parent=11 // pred_fallthru
        _
    $region12: #{tpu_custom_call.1} parent=5 // pred_fallthru
      _
    %p155 = scmp.lt.s32.totalorder %s9, 2
    // Predicated region
    $region21: #{tpu_custom_call.1} parent=5 // pred_check
      %p156 = pneg %p155
    $region22: #{tpu_custom_call.1} parent=5 // pred_check_branch
      %158 = sbr.rel (%p156) target = $region24
    $region23: #{tpu_custom_call.1} parent=5 // pred_region
      // Predicated region
      $region25: #{tpu_custom_call.1} parent=23 // pred_check
        %p159 = pneg %p41
      $region26: #{tpu_custom_call.1} parent=23 // pred_check_branch
        %161 = sbr.rel (%p159) target = $region28
      $region27: #{tpu_custom_call.1} parent=23 // pred_region
        %p162 = scmp.lt.s32.totalorder %s17, 1
        %s163 = scalar_select %p162, %s17, 1
        %s164 = smul.addr %s163, 7
        %s165 = smul.addr %s164, 4
        %s166 = scalar_lea.vmem %s0, %s165
      $region28: #{tpu_custom_call.1} parent=23 // pred_fallthru
        _
    $region24: #{tpu_custom_call.1} parent=5 // pred_fallthru
      _
    %p167 = scmp.le.s32.totalorder 1, %s9
    %p168 = scmp.lt.s32.totalorder %s9, 3
    %p169 = pnand %p167, %p168
    %p170 = pneg %p169
    // Predicated region
    $region29: #{tpu_custom_call.1} parent=5 // pred_check
      _
    $region30: #{tpu_custom_call.1} parent=5 // pred_check_branch
      %172 = sbr.rel (%p169) target = $region32
    $region31: #{tpu_custom_call.1} parent=5 // pred_region
      %s173 = ssub.s32 %s9, 1
      %p174 = scmp.lt.s32.totalorder %s19, 1
      %s175 = scalar_select %p174, %s19, 1
      %s176 = smul.addr %s175, 7
      %s177 = smul.addr %s176, 4
      %s178 = scalar_lea.vmem %s0, %s177
      %p179 = pneg %p47
      %p180 = pneg %p44
      %p181 = scmp.lt.s32.totalorder %s18, 0
      %s182 = scalar_select %p181, %s18, 0
      %s183 = smul.addr %s182, 4
      %s184 = scalar_lea.vmem %s1, %s183
      %p185 = pneg %p73
      %p186 = pneg %p70
      %p187 = scmp.lt.s32.totalorder %s18, 0
      %s188 = scalar_select %p187, %s18, 0
      %s189 = scalar_lea.vmem %s2, %s188
      %p190 = pneg %p99
      %p191 = pneg %p96
      %p192 = pneg %p127
      %p193 = pneg %p124
      %p194 = scmp.lt.s32.totalorder %s19, 1
      %s195 = scalar_select %p194, %s19, 1
      %p196 = scmp.lt.s32.totalorder %s18, 0
      %s197 = scalar_select %p196, %s18, 0
      %s198 = smul.addr %s195, 5
      %s199 = sadd.s32 %s197, %s198
      %s200 = smul.addr %s199, 8
      %s201 = scalar_lea.vmem %s3, %s200
      %p202 = scmp.lt.s32.totalorder %s19, 1
      %s203 = scalar_select %p202, %s19, 1
      %s204 = smul.addr %s203, 7
      %s205 = smul.addr %s204, 4
      %s206 = scalar_lea.vmem %s0, %s205
      %p207 = scmp.lt.s32.totalorder %s18, 0
      %s208 = scalar_select %p207, %s18, 0
      %s209 = smul.addr %s208, 4
      %s210 = scalar_lea.vmem %s1, %s209
      %p211 = scmp.lt.s32.totalorder %s18, 0
      %s212 = scalar_select %p211, %s18, 0
      %s213 = scalar_lea.vmem %s2, %s212
      %p214 = scmp.lt.s32.totalorder %s19, 1
      %s215 = scalar_select %p214, %s19, 1
      %p216 = scmp.lt.s32.totalorder %s18, 0
      %s217 = scalar_select %p216, %s18, 0
      %s218 = smul.addr %s215, 5
      %s219 = sadd.s32 %s217, %s218
      %s220 = smul.addr %s219, 8
      %s221 = scalar_lea.vmem %s3, %s220
      %v223 = vld [vmem:[%s206] sm:$0xf]
      %v224 = vld [vmem:[%s206 + $0x4] sm:$0xf]
      %v225 = vld [vmem:[%s206 + $0x8] sm:$0xf]
      %v226 = vld [vmem:[%s206 + $0xc] sm:$0xf]
      %v227 = vld [vmem:[%s206 + $0x10] sm:$0xf]
      %v228 = vld [vmem:[%s210] sm:$0xf]
      %v234 = vunpack.c.l.b16 %v223
      %v235 = vunpack.c.l.b16 %v224
      %v236 = vunpack.c.l.b16 %v225
      %v237 = vunpack.c.l.b16 %v226
      %v238 = vunpack.c.l.b16 %v227
      %v239 = vpack.c.b16 %v235, %v234
      %v240 = vpack.c.b16 %v237, %v236
      %v241 = vpack.c.b16 %v238, %v238
      %vm242 = vcmask 64512
      %v244 = vsel %vm242, %v239, 0
      %v247 = vsel %vm242, %v240, 0
      %v250 = vsel %vm242, %v241, 0
      %vm252 = vcmask 1043456
      %v254 = vsel %vm252, %v228, 0
      %256 = vmatprep.subr.bf16.mxu0 0
      %257 = vmatpush1.bf16.msra.mxu0 %v254
      %258 = vmatprep.subr.bf16.mxu0 0
      %259 = vmatpush1.bf16.msra.mxu0 0
      %260 = vmatprep.subr.bf16.mxu0 0
      %261 = vmatpush1.bf16.msra.mxu0 0
      %262 = vmatprep.subr.bf16.mxu0 0
      %263 = vmatpush1.bf16.msra.mxu0 0
      %264 = vmatprep.subr.bf16.mxu0 0
      %265 = vmatpush1.bf16.msra.mxu0 0
      %266 = vmatprep.subr.bf16.mxu0 0
      %267 = vmatpush1.bf16.msra.mxu0 0
      %268 = vmatprep.subr.bf16.mxu0 0
      %269 = vmatpush1.bf16.msra.mxu0 0
      %270 = vmatprep.subr.bf16.mxu0 0
      %271 = vmatpush1.bf16.msra.mxu0 0
      %272 = vmatprep.subr.bf16.mxu0 0
      %273 = vmatpush1.bf16.msra.mxu0 0
      %274 = vmatprep.subr.bf16.mxu0 0
      %275 = vmatpush1.bf16.msra.mxu0 0
      %276 = vmatprep.subr.bf16.mxu0 0
      %277 = vmatpush1.bf16.msra.mxu0 0
      %278 = vmatprep.subr.bf16.mxu0 0
      %279 = vmatpush1.bf16.msra.mxu0 0
      %280 = vmatprep.subr.bf16.mxu0 0
      %281 = vmatpush1.bf16.msra.mxu0 0
      %282 = vmatprep.subr.bf16.mxu0 0
      %283 = vmatpush1.bf16.msra.mxu0 0
      %284 = vmatprep.subr.bf16.mxu0 0
      %285 = vmatpush1.bf16.msra.mxu0 0
      %286 = vmatprep.subr.bf16.mxu0 0
      %287 = vmatpush1.bf16.msra.mxu0 0
      %288 = vmatprep.mubr.bf16.mxu0 0
      %289 = vmatmul.mubr.bf16.gmra.mrb[0].mxu0 %v244
      %v290 = vpop.f32.mrb[0].mxu0
      %v291 = vadd.f32 0.0, %v290
      %v292 = vpop.f32.mrb[0].mxu0
      %v293 = vpop.f32.mrb[0].mxu0
      %v294 = vadd.f32 0.0, %v293
      %v295 = vpop.f32.mrb[0].mxu0
      %296 = vmatprep.mubr.bf16.mxu0 0
      %297 = vmatmul.mubr.bf16.gmra.mrb[0].mxu0 %v247
      %v298 = vpop.f32.mrb[0].mxu0
      %v299 = vadd.f32 0.0, %v298
      %v300 = vpop.f32.mrb[0].mxu0
      %v301 = vpop.f32.mrb[0].mxu0
      %v302 = vadd.f32 0.0, %v301
      %v303 = vpop.f32.mrb[0].mxu0
      %304 = vmatprep.mubr.bf16.mxu0 0
      %305 = vmatmul.mubr.bf16.gmra.mrb[0].mxu0 %v250
      %v306 = vpop.f32.mrb[0].mxu0
      %v307 = vadd.f32 0.0, %v306
      %v308 = vpop.f32.mrb[0].mxu0
      %v309 = vpop.f32.mrb[0].mxu0
      %v310 = vpop.f32.mrb[0].mxu0
      %311 = vdwg.mxu0
      %vm312 = vcmask 130048
      %313 = vst.msk [vmem:[#allocation2] sm:$0xff] %vm312, %v291
      %314 = vst.msk [vmem:[#allocation2 + $0x8] sm:$0xff] %vm312, %v294
      %315 = vst.msk [vmem:[#allocation2 + $0x10] sm:$0xff] %vm312, %v299
      %316 = vst.msk [vmem:[#allocation2 + $0x18] sm:$0xff] %vm312, %v302
      %317 = vst.msk [vmem:[#allocation2 + $0x20] sm:$0xff] %vm312, %v307
      %v318 = vld [vmem:[#allocation2] sm:$0xff]
      %v319 = vld [vmem:[#allocation2 + $0x8] sm:$0xff]
      %v320 = vld [vmem:[#allocation2 + $0x10] sm:$0xff]
      %v321 = vld [vmem:[#allocation2 + $0x18] sm:$0xff]
      %v322 = vld [vmem:[#allocation2 + $0x20] sm:$0xff]
      %v323 = vld [vmem:[%s206] sm:$0xf]
      %v324 = vld [vmem:[%s206 + $0x4] sm:$0xf]
      %v325 = vld [vmem:[%s206 + $0x8] sm:$0xf]
      %v326 = vld [vmem:[%s206 + $0xc] sm:$0xf]
      %v327 = vld [vmem:[%s206 + $0x10] sm:$0xf]
      %v328 = vld [vmem:[%s206 + $0x14] sm:$0x1]
      %s329 = scalar_lea.vmem %s210, 4
      %v330 = vld [vmem:[%s329] sm:$0xf]
      %v337 = vunpack.c.l.b16 %v323
      %v338 = vunpack.c.l.b16 %v324
      %v339 = vunpack.c.l.b16 %v325
      %v340 = vunpack.c.l.b16 %v326
      %v341 = vunpack.c.l.b16 %v327
      %v342 = vunpack.c.l.b16 %v328
      %v343 = vpack.c.b16 %v338, %v337
      %v344 = vpack.c.b16 %v340, %v339
      %v345 = vpack.c.b16 %v342, %v341
      %vm346 = vsmask.f32 7424
      %v348 = vshrl.u32 %v343, 16
      %v350 = vshll.u32 %v343, 16
      %v352 = vrot.slane %v350, 1
      %v353 = vor.u32 %v348, %v352
      %v355 = vshll.u32 %v344, 16
      %v357 = vrot.slane %v355, 1
      %v358 = vsel %vm346, %v353, %v357
      %v359 = vshrl.u32 %v344, 16
      %v361 = vor.u32 %v359, %v357
      %v363 = vshll.u32 %v345, 16
      %v365 = vrot.slane %v363, 1
      %v366 = vsel %vm346, %v361, %v365
      %v367 = vshrl.u32 %v345, 16
      %v369 = vor.u32 %v367, %v365
      %v371 = vsel %vm242, %v358, 0
      %v374 = vsel %vm242, %v366, 0
      %v377 = vsel %vm242, %v369, 0
      %v380 = vsel %vm252, %v330, 0
      %382 = vmatprep.subr.bf16.mxu0 0
      %383 = vmatpush1.bf16.msra.mxu0 %v380
      %384 = vmatprep.subr.bf16.mxu0 0
      %385 = vmatpush1.bf16.msra.mxu0 0
      %386 = vmatprep.subr.bf16.mxu0 0
      %387 = vmatpush1.bf16.msra.mxu0 0
      %388 = vmatprep.subr.bf16.mxu0 0
      %389 = vmatpush1.bf16.msra.mxu0 0
      %390 = vmatprep.subr.bf16.mxu0 0
      %391 = vmatpush1.bf16.msra.mxu0 0
      %392 = vmatprep.subr.bf16.mxu0 0
      %393 = vmatpush1.bf16.msra.mxu0 0
      %394 = vmatprep.subr.bf16.mxu0 0
      %395 = vmatpush1.bf16.msra.mxu0 0
      %396 = vmatprep.subr.bf16.mxu0 0
      %397 = vmatpush1.bf16.msra.mxu0 0
      %398 = vmatprep.subr.bf16.mxu0 0
      %399 = vmatpush1.bf16.msra.mxu0 0
      %400 = vmatprep.subr.bf16.mxu0 0
      %401 = vmatpush1.bf16.msra.mxu0 0
      %402 = vmatprep.subr.bf16.mxu0 0
      %403 = vmatpush1.bf16.msra.mxu0 0
      %404 = vmatprep.subr.bf16.mxu0 0
      %405 = vmatpush1.bf16.msra.mxu0 0
      %406 = vmatprep.subr.bf16.mxu0 0
      %407 = vmatpush1.bf16.msra.mxu0 0
      %408 = vmatprep.subr.bf16.mxu0 0
      %409 = vmatpush1.bf16.msra.mxu0 0
      %410 = vmatprep.subr.bf16.mxu0 0
      %411 = vmatpush1.bf16.msra.mxu0 0
      %412 = vmatprep.subr.bf16.mxu0 0
      %413 = vmatpush1.bf16.msra.mxu0 0
      %414 = vmatprep.mubr.bf16.mxu0 0
      %415 = vmatmul.mubr.bf16.gmra.mrb[0].mxu0 %v371
      %v416 = vpop.f32.mrb[0].mxu0
      %v417 = vadd.f32 0.0, %v416
      %v418 = vpop.f32.mrb[0].mxu0
      %v419 = vpop.f32.mrb[0].mxu0
      %v420 = vadd.f32 0.0, %v419
      %v421 = vpop.f32.mrb[0].mxu0
      %422 = vmatprep.mubr.bf16.mxu0 0
      %423 = vmatmul.mubr.bf16.gmra.mrb[0].mxu0 %v374
      %v424 = vpop.f32.mrb[0].mxu0
      %v425 = vadd.f32 0.0, %v424
      %v426 = vpop.f32.mrb[0].mxu0
      %v427 = vpop.f32.mrb[0].mxu0
      %v428 = vadd.f32 0.0, %v427
      %v429 = vpop.f32.mrb[0].mxu0
      %430 = vmatprep.mubr.bf16.mxu0 0
      %431 = vmatmul.mubr.bf16.gmra.mrb[0].mxu0 %v377
      %v432 = vpop.f32.mrb[0].mxu0
      %v433 = vadd.f32 0.0, %v432
      %v434 = vpop.f32.mrb[0].mxu0
      %v435 = vpop.f32.mrb[0].mxu0
      %v436 = vpop.f32.mrb[0].mxu0
      %437 = vdwg.mxu0
      %v438 = vadd.f32 %v318, %v417
      %v439 = vadd.f32 %v319, %v420
      %v440 = vadd.f32 %v320, %v425
      %v441 = vadd.f32 %v321, %v428
      %v442 = vadd.f32 %v322, %v433
      %443 = vst.msk [vmem:[#allocation2] sm:$0xff] %vm312, %v438
      %444 = vst.msk [vmem:[#allocation2 + $0x8] sm:$0xff] %vm312, %v439
      %445 = vst.msk [vmem:[#allocation2 + $0x10] sm:$0xff] %vm312, %v440
      %446 = vst.msk [vmem:[#allocation2 + $0x18] sm:$0xff] %vm312, %v441
      %447 = vst.msk [vmem:[#allocation2 + $0x20] sm:$0xff] %vm312, %v442
      %v448 = vld [vmem:[#allocation2] sm:$0xff]
      %v449 = vld [vmem:[#allocation2 + $0x8] sm:$0xff]
      %v450 = vld [vmem:[#allocation2 + $0x10] sm:$0xff]
      %v451 = vld [vmem:[#allocation2 + $0x18] sm:$0xff]
      %v452 = vld [vmem:[#allocation2 + $0x20] sm:$0xff]
      %v453 = vld [vmem:[%s206] sm:$0xe]
      %v454 = vld [vmem:[%s206 + $0x4] sm:$0xf]
      %v455 = vld [vmem:[%s206 + $0x8] sm:$0xf]
      %v456 = vld [vmem:[%s206 + $0xc] sm:$0xf]
      %v457 = vld [vmem:[%s206 + $0x10] sm:$0xf]
      %v458 = vld [vmem:[%s206 + $0x14] sm:$0x1]
      %s459 = scalar_lea.vmem %s210, 8
      %v460 = vld [vmem:[%s459] sm:$0xf]
      %v467 = vunpack.c.l.b16 %v453
      %v468 = vunpack.c.l.b16 %v454
      %v469 = vunpack.c.l.b16 %v455
      %v470 = vunpack.c.l.b16 %v456
      %v471 = vunpack.c.l.b16 %v457
      %v472 = vunpack.c.l.b16 %v458
      %v473 = vpack.c.b16 %v468, %v467
      %v474 = vpack.c.b16 %v470, %v469
      %v475 = vpack.c.b16 %v472, %v471
      %vm476 = vcmask 1046528
      %v477 = vrot.slane %v473, 1
      %v478 = vrot.slane %v474, 1
      %v479 = vsel %vm476, %v477, %v478
      %v480 = vrot.slane %v475, 1
      %v481 = vsel %vm476, %v478, %v480
      %v483 = vsel %vm242, %v479, 0
      %v486 = vsel %vm242, %v481, 0
      %v489 = vsel %vm242, %v480, 0
      %v492 = vsel %vm252, %v460, 0
      %494 = vmatprep.subr.bf16.mxu0 0
      %495 = vmatpush1.bf16.msra.mxu0 %v492
      %496 = vmatprep.subr.bf16.mxu0 0
      %497 = vmatpush1.bf16.msra.mxu0 0
      %498 = vmatprep.subr.bf16.mxu0 0
      %499 = vmatpush1.bf16.msra.mxu0 0
      %500 = vmatprep.subr.bf16.mxu0 0
      %501 = vmatpush1.bf16.msra.mxu0 0
      %502 = vmatprep.subr.bf16.mxu0 0
      %503 = vmatpush1.bf16.msra.mxu0 0
      %504 = vmatprep.subr.bf16.mxu0 0
      %505 = vmatpush1.bf16.msra.mxu0 0
      %506 = vmatprep.subr.bf16.mxu0 0
      %507 = vmatpush1.bf16.msra.mxu0 0
      %508 = vmatprep.subr.bf16.mxu0 0
      %509 = vmatpush1.bf16.msra.mxu0 0
      %510 = vmatprep.subr.bf16.mxu0 0
      %511 = vmatpush1.bf16.msra.mxu0 0
      %512 = vmatprep.subr.bf16.mxu0 0
      %513 = vmatpush1.bf16.msra.mxu0 0
      %514 = vmatprep.subr.bf16.mxu0 0
      %515 = vmatpush1.bf16.msra.mxu0 0
      %516 = vmatprep.subr.bf16.mxu0 0
      %517 = vmatpush1.bf16.msra.mxu0 0
      %518 = vmatprep.subr.bf16.mxu0 0
      %519 = vmatpush1.bf16.msra.mxu0 0
      %520 = vmatprep.subr.bf16.mxu0 0
      %521 = vmatpush1.bf16.msra.mxu0 0
      %522 = vmatprep.subr.bf16.mxu0 0
      %523 = vmatpush1.bf16.msra.mxu0 0
      %524 = vmatprep.subr.bf16.mxu0 0
      %525 = vmatpush1.bf16.msra.mxu0 0
      %526 = vmatprep.mubr.bf16.mxu0 0
      %527 = vmatmul.mubr.bf16.gmra.mrb[0].mxu0 %v483
      %v528 = vpop.f32.mrb[0].mxu0
      %v529 = vadd.f32 0.0, %v528
      %v530 = vpop.f32.mrb[0].mxu0
      %v531 = vpop.f32.mrb[0].mxu0
      %v532 = vadd.f32 0.0, %v531
      %v533 = vpop.f32.mrb[0].mxu0
      %534 = vmatprep.mubr.bf16.mxu0 0
      %535 = vmatmul.mubr.bf16.gmra.mrb[0].mxu0 %v486
      %v536 = vpop.f32.mrb[0].mxu0
      %v537 = vadd.f32 0.0, %v536
      %v538 = vpop.f32.mrb[0].mxu0
      %v539 = vpop.f32.mrb[0].mxu0
      %v540 = vadd.f32 0.0, %v539
      %v541 = vpop.f32.mrb[0].mxu0
      %542 = vmatprep.mubr.bf16.mxu0 0
      %543 = vmatmul.mubr.bf16.gmra.mrb[0].mxu0 %v489
      %v544 = vpop.f32.mrb[0].mxu0
      %v545 = vadd.f32 0.0, %v544
      %v546 = vpop.f32.mrb[0].mxu0
      %v547 = vpop.f32.mrb[0].mxu0
      %v548 = vpop.f32.mrb[0].mxu0
      %549 = vdwg.mxu0
      %v550 = vadd.f32 %v448, %v529
      %v551 = vadd.f32 %v449, %v532
      %v552 = vadd.f32 %v450, %v537
      %v553 = vadd.f32 %v451, %v540
      %v554 = vadd.f32 %v452, %v545
      %555 = vst.msk [vmem:[#allocation2] sm:$0xff] %vm312, %v550
      %556 = vst.msk [vmem:[#allocation2 + $0x8] sm:$0xff] %vm312, %v551
      %557 = vst.msk [vmem:[#allocation2 + $0x10] sm:$0xff] %vm312, %v552
      %558 = vst.msk [vmem:[#allocation2 + $0x18] sm:$0xff] %vm312, %v553
      %559 = vst.msk [vmem:[#allocation2 + $0x20] sm:$0xff] %vm312, %v554
      %v560 = vld [vmem:[#allocation2] sm:$0xff]
      %v561 = vld [vmem:[#allocation2 + $0x8] sm:$0xff]
      %v562 = vld [vmem:[#allocation2 + $0x10] sm:$0xff]
      %v563 = vld [vmem:[#allocation2 + $0x18] sm:$0xff]
      %v564 = vld [vmem:[#allocation2 + $0x20] sm:$0xff]
      %v565 = vld [vmem:[%s206] sm:$0x8]
      %v566 = vld [vmem:[%s206 + $0x4] sm:$0xf]
      %v567 = vld [vmem:[%s206 + $0x8] sm:$0xf]
      %v568 = vld [vmem:[%s206 + $0xc] sm:$0xf]
      %v569 = vld [vmem:[%s206 + $0x10] sm:$0xf]
      %v570 = vld [vmem:[%s206 + $0x14] sm:$0xf]
      %s571 = scalar_lea.vmem %s210, 12
      %v572 = vld [vmem:[%s571] sm:$0xf]
      %v579 = vunpack.c.l.b16 %v565
      %v580 = vunpack.c.l.b16 %v566
      %v581 = vunpack.c.l.b16 %v567
      %v582 = vunpack.c.l.b16 %v568
      %v583 = vunpack.c.l.b16 %v569
      %v584 = vunpack.c.l.b16 %v570
      %v585 = vpack.c.b16 %v580, %v579
      %v586 = vpack.c.b16 %v582, %v581
      %v587 = vpack.c.b16 %v584, %v583
      %vm588 = vsmask.f32 4352
      %v590 = vshrl.u32 %v585, 16
      %v592 = vrot.slane %v590, 3
      %v593 = vshll.u32 %v585, 16
      %v595 = vrot.slane %v593, 4
      %v596 = vor.u32 %v592, %v595
      %v598 = vshrl.u32 %v586, 16
      %v600 = vrot.slane %v598, 3
      %v601 = vshll.u32 %v586, 16
      %v603 = vrot.slane %v601, 4
      %v604 = vor.u32 %v600, %v603
      %v605 = vsel %vm588, %v596, %v604
      %v607 = vshrl.u32 %v587, 16
      %v609 = vrot.slane %v607, 3
      %v610 = vshll.u32 %v587, 16
      %v612 = vrot.slane %v610, 4
      %v613 = vor.u32 %v609, %v612
      %v614 = vsel %vm588, %v604, %v613
      %v616 = vsel %vm242, %v605, 0
      %v619 = vsel %vm242, %v614, 0
      %v622 = vsel %vm242, %v613, 0
      %v625 = vsel %vm252, %v572, 0
      %627 = vmatprep.subr.bf16.mxu0 0
      %628 = vmatpush1.bf16.msra.mxu0 %v625
      %629 = vmatprep.subr.bf16.mxu0 0
      %630 = vmatpush1.bf16.msra.mxu0 0
      %631 = vmatprep.subr.bf16.mxu0 0
      %632 = vmatpush1.bf16.msra.mxu0 0
      %633 = vmatprep.subr.bf16.mxu0 0
      %634 = vmatpush1.bf16.msra.mxu0 0
      %635 = vmatprep.subr.bf16.mxu0 0
      %636 = vmatpush1.bf16.msra.mxu0 0
      %637 = vmatprep.subr.bf16.mxu0 0
      %638 = vmatpush1.bf16.msra.mxu0 0
      %639 = vmatprep.subr.bf16.mxu0 0
      %640 = vmatpush1.bf16.msra.mxu0 0
      %641 = vmatprep.subr.bf16.mxu0 0
      %642 = vmatpush1.bf16.msra.mxu0 0
      %643 = vmatprep.subr.bf16.mxu0 0
      %644 = vmatpush1.bf16.msra.mxu0 0
      %645 = vmatprep.subr.bf16.mxu0 0
      %646 = vmatpush1.bf16.msra.mxu0 0
      %647 = vmatprep.subr.bf16.mxu0 0
      %648 = vmatpush1.bf16.msra.mxu0 0
      %649 = vmatprep.subr.bf16.mxu0 0
      %650 = vmatpush1.bf16.msra.mxu0 0
      %651 = vmatprep.subr.bf16.mxu0 0
      %652 = vmatpush1.bf16.msra.mxu0 0
      %653 = vmatprep.subr.bf16.mxu0 0
      %654 = vmatpush1.bf16.msra.mxu0 0
      %655 = vmatprep.subr.bf16.mxu0 0
      %656 = vmatpush1.bf16.msra.mxu0 0
      %657 = vmatprep.subr.bf16.mxu0 0
      %658 = vmatpush1.bf16.msra.mxu0 0
      %659 = vmatprep.mubr.bf16.mxu0 0
      %660 = vmatmul.mubr.bf16.gmra.mrb[0].mxu0 %v616
      %v661 = vpop.f32.mrb[0].mxu0
      %v662 = vadd.f32 0.0, %v661
      %v663 = vpop.f32.mrb[0].mxu0
      %v664 = vpop.f32.mrb[0].mxu0
      %v665 = vadd.f32 0.0, %v664
      %v666 = vpop.f32.mrb[0].mxu0
      %667 = vmatprep.mubr.bf16.mxu0 0
      %668 = vmatmul.mubr.bf16.gmra.mrb[0].mxu0 %v619
      %v669 = vpop.f32.mrb[0].mxu0
      %v670 = vadd.f32 0.0, %v669
      %v671 = vpop.f32.mrb[0].mxu0
      %v672 = vpop.f32.mrb[0].mxu0
      %v673 = vadd.f32 0.0, %v672
      %v674 = vpop.f32.mrb[0].mxu0
      %675 = vmatprep.mubr.bf16.mxu0 0
      %676 = vmatmul.mubr.bf16.gmra.mrb[0].mxu0 %v622
      %v677 = vpop.f32.mrb[0].mxu0
      %v678 = vadd.f32 0.0, %v677
      %v679 = vpop.f32.mrb[0].mxu0
      %v680 = vpop.f32.mrb[0].mxu0
      %v681 = vpop.f32.mrb[0].mxu0
      %682 = vdwg.mxu0
      %v683 = vadd.f32 %v560, %v662
      %v684 = vadd.f32 %v561, %v665
      %v685 = vadd.f32 %v562, %v670
      %v686 = vadd.f32 %v563, %v673
      %v687 = vadd.f32 %v564, %v678
      %688 = vst.msk [vmem:[#allocation2] sm:$0xff] %vm312, %v683
      %689 = vst.msk [vmem:[#allocation2 + $0x8] sm:$0xff] %vm312, %v684
      %690 = vst.msk [vmem:[#allocation2 + $0x10] sm:$0xff] %vm312, %v685
      %691 = vst.msk [vmem:[#allocation2 + $0x18] sm:$0xff] %vm312, %v686
      %692 = vst.msk [vmem:[#allocation2 + $0x20] sm:$0xff] %vm312, %v687
      %v693 = vld [vmem:[#allocation2] sm:$0xff]
      %v694 = vld [vmem:[#allocation2 + $0x8] sm:$0xff]
      %v695 = vld [vmem:[#allocation2 + $0x10] sm:$0xff]
      %v696 = vld [vmem:[#allocation2 + $0x18] sm:$0xff]
      %v697 = vld [vmem:[#allocation2 + $0x20] sm:$0xff]
      %v698 = vld [vmem:[%s206 + $0x4] sm:$0xf]
      %v699 = vld [vmem:[%s206 + $0x8] sm:$0xf]
      %v700 = vld [vmem:[%s206 + $0xc] sm:$0xf]
      %v701 = vld [vmem:[%s206 + $0x10] sm:$0xf]
      %v702 = vld [vmem:[%s206 + $0x14] sm:$0xf]
      %s703 = scalar_lea.vmem %s210, 16
      %v704 = vld [vmem:[%s703] sm:$0xf]
      %v710 = vunpack.c.l.b16 %v698
      %v711 = vunpack.c.l.b16 %v699
      %v712 = vunpack.c.l.b16 %v700
      %v713 = vunpack.c.l.b16 %v701
      %v714 = vunpack.c.l.b16 %v702
      %v715 = vpack.c.b16 %v711, %v710
      %v716 = vpack.c.b16 %v713, %v712
      %v717 = vpack.c.b16 %v714, %v714
      %v719 = vsel %vm242, %v715, 0
      %v722 = vsel %vm242, %v716, 0
      %v725 = vsel %vm242, %v717, 0
      %v728 = vsel %vm252, %v704, 0
      %730 = vmatprep.subr.bf16.mxu0 0
      %731 = vmatpush1.bf16.msra.mxu0 %v728
      %732 = vmatprep.subr.bf16.mxu0 0
      %733 = vmatpush1.bf16.msra.mxu0 0
      %734 = vmatprep.subr.bf16.mxu0 0
      %735 = vmatpush1.bf16.msra.mxu0 0
      %736 = vmatprep.subr.bf16.mxu0 0
      %737 = vmatpush1.bf16.msra.mxu0 0
      %738 = vmatprep.subr.bf16.mxu0 0
      %739 = vmatpush1.bf16.msra.mxu0 0
      %740 = vmatprep.subr.bf16.mxu0 0
      %741 = vmatpush1.bf16.msra.mxu0 0
      %742 = vmatprep.subr.bf16.mxu0 0
      %743 = vmatpush1.bf16.msra.mxu0 0
      %744 = vmatprep.subr.bf16.mxu0 0
      %745 = vmatpush1.bf16.msra.mxu0 0
      %746 = vmatprep.subr.bf16.mxu0 0
      %747 = vmatpush1.bf16.msra.mxu0 0
      %748 = vmatprep.subr.bf16.mxu0 0
      %749 = vmatpush1.bf16.msra.mxu0 0
      %750 = vmatprep.subr.bf16.mxu0 0
      %751 = vmatpush1.bf16.msra.mxu0 0
      %752 = vmatprep.subr.bf16.mxu0 0
      %753 = vmatpush1.bf16.msra.mxu0 0
      %754 = vmatprep.subr.bf16.mxu0 0
      %755 = vmatpush1.bf16.msra.mxu0 0
      %756 = vmatprep.subr.bf16.mxu0 0
      %757 = vmatpush1.bf16.msra.mxu0 0
      %758 = vmatprep.subr.bf16.mxu0 0
      %759 = vmatpush1.bf16.msra.mxu0 0
      %760 = vmatprep.subr.bf16.mxu0 0
      %761 = vmatpush1.bf16.msra.mxu0 0
      %762 = vmatprep.mubr.bf16.mxu0 0
      %763 = vmatmul.mubr.bf16.gmra.mrb[0].mxu0 %v719
      %v764 = vpop.f32.mrb[0].mxu0
      %v765 = vadd.f32 0.0, %v764
      %v766 = vpop.f32.mrb[0].mxu0
      %v767 = vpop.f32.mrb[0].mxu0
      %v768 = vadd.f32 0.0, %v767
      %v769 = vpop.f32.mrb[0].mxu0
      %770 = vmatprep.mubr.bf16.mxu0 0
      %771 = vmatmul.mubr.bf16.gmra.mrb[0].mxu0 %v722
      %v772 = vpop.f32.mrb[0].mxu0
      %v773 = vadd.f32 0.0, %v772
      %v774 = vpop.f32.mrb[0].mxu0
      %v775 = vpop.f32.mrb[0].mxu0
      %v776 = vadd.f32 0.0, %v775
      %v777 = vpop.f32.mrb[0].mxu0
      %778 = vmatprep.mubr.bf16.mxu0 0
      %779 = vmatmul.mubr.bf16.gmra.mrb[0].mxu0 %v725
      %v780 = vpop.f32.mrb[0].mxu0
      %v781 = vadd.f32 0.0, %v780
      %v782 = vpop.f32.mrb[0].mxu0
      %v783 = vpop.f32.mrb[0].mxu0
      %v784 = vpop.f32.mrb[0].mxu0
      %785 = vdwg.mxu0
      %v786 = vadd.f32 %v693, %v765
      %v787 = vadd.f32 %v694, %v768
      %v788 = vadd.f32 %v695, %v773
      %v789 = vadd.f32 %v696, %v776
      %v790 = vadd.f32 %v697, %v781
      %791 = vst.msk [vmem:[#allocation2] sm:$0xff] %vm312, %v786
      %792 = vst.msk [vmem:[#allocation2 + $0x8] sm:$0xff] %vm312, %v787
      %793 = vst.msk [vmem:[#allocation2 + $0x10] sm:$0xff] %vm312, %v788
      %794 = vst.msk [vmem:[#allocation2 + $0x18] sm:$0xff] %vm312, %v789
      %795 = vst.msk [vmem:[#allocation2 + $0x20] sm:$0xff] %vm312, %v790
      %v796 = vld [vmem:[#allocation2] sm:$0xff]
      %v797 = vld [vmem:[#allocation2 + $0x8] sm:$0xff]
      %v798 = vld [vmem:[#allocation2 + $0x10] sm:$0xff]
      %v799 = vld [vmem:[#allocation2 + $0x18] sm:$0xff]
      %v800 = vld [vmem:[#allocation2 + $0x20] sm:$0xff]
      %v801 = vld [vmem:[%s206 + $0x4] sm:$0xf]
      %v802 = vld [vmem:[%s206 + $0x8] sm:$0xf]
      %v803 = vld [vmem:[%s206 + $0xc] sm:$0xf]
      %v804 = vld [vmem:[%s206 + $0x10] sm:$0xf]
      %v805 = vld [vmem:[%s206 + $0x14] sm:$0xf]
      %v806 = vld [vmem:[%s206 + $0x18] sm:$0x1]
      %s807 = scalar_lea.vmem %s210, 20
      %v808 = vld [vmem:[%s807] sm:$0xf]
      %v815 = vunpack.c.l.b16 %v801
      %v816 = vunpack.c.l.b16 %v802
      %v817 = vunpack.c.l.b16 %v803
      %v818 = vunpack.c.l.b16 %v804
      %v819 = vunpack.c.l.b16 %v805
      %v820 = vunpack.c.l.b16 %v806
      %v821 = vpack.c.b16 %v816, %v815
      %v822 = vpack.c.b16 %v818, %v817
      %v823 = vpack.c.b16 %v820, %v819
      %v825 = vshrl.u32 %v821, 16
      %v827 = vshll.u32 %v821, 16
      %v829 = vrot.slane %v827, 1
      %v830 = vor.u32 %v825, %v829
      %v832 = vshll.u32 %v822, 16
      %v834 = vrot.slane %v832, 1
      %v835 = vsel %vm346, %v830, %v834
      %v836 = vshrl.u32 %v822, 16
      %v838 = vor.u32 %v836, %v834
      %v840 = vshll.u32 %v823, 16
      %v842 = vrot.slane %v840, 1
      %v843 = vsel %vm346, %v838, %v842
      %v844 = vshrl.u32 %v823, 16
      %v846 = vor.u32 %v844, %v842
      %v848 = vsel %vm242, %v835, 0
      %v851 = vsel %vm242, %v843, 0
      %v854 = vsel %vm242, %v846, 0
      %v857 = vsel %vm252, %v808, 0
      %859 = vmatprep.subr.bf16.mxu0 0
      %860 = vmatpush1.bf16.msra.mxu0 %v857
      %861 = vmatprep.subr.bf16.mxu0 0
      %862 = vmatpush1.bf16.msra.mxu0 0
      %863 = vmatprep.subr.bf16.mxu0 0
      %864 = vmatpush1.bf16.msra.mxu0 0
      %865 = vmatprep.subr.bf16.mxu0 0
      %866 = vmatpush1.bf16.msra.mxu0 0
      %867 = vmatprep.subr.bf16.mxu0 0
      %868 = vmatpush1.bf16.msra.mxu0 0
      %869 = vmatprep.subr.bf16.mxu0 0
      %870 = vmatpush1.bf16.msra.mxu0 0
      %871 = vmatprep.subr.bf16.mxu0 0
      %872 = vmatpush1.bf16.msra.mxu0 0
      %873 = vmatprep.subr.bf16.mxu0 0
      %874 = vmatpush1.bf16.msra.mxu0 0
      %875 = vmatprep.subr.bf16.mxu0 0
      %876 = vmatpush1.bf16.msra.mxu0 0
      %877 = vmatprep.subr.bf16.mxu0 0
      %878 = vmatpush1.bf16.msra.mxu0 0
      %879 = vmatprep.subr.bf16.mxu0 0
      %880 = vmatpush1.bf16.msra.mxu0 0
      %881 = vmatprep.subr.bf16.mxu0 0
      %882 = vmatpush1.bf16.msra.mxu0 0
      %883 = vmatprep.subr.bf16.mxu0 0
      %884 = vmatpush1.bf16.msra.mxu0 0
      %885 = vmatprep.subr.bf16.mxu0 0
      %886 = vmatpush1.bf16.msra.mxu0 0
      %887 = vmatprep.subr.bf16.mxu0 0
      %888 = vmatpush1.bf16.msra.mxu0 0
      %889 = vmatprep.subr.bf16.mxu0 0
      %890 = vmatpush1.bf16.msra.mxu0 0
      %891 = vmatprep.mubr.bf16.mxu0 0
      %892 = vmatmul.mubr.bf16.gmra.mrb[0].mxu0 %v848
      %v893 = vpop.f32.mrb[0].mxu0
      %v894 = vadd.f32 0.0, %v893
      %v895 = vpop.f32.mrb[0].mxu0
      %v896 = vpop.f32.mrb[0].mxu0
      %v897 = vadd.f32 0.0, %v896
      %v898 = vpop.f32.mrb[0].mxu0
      %899 = vmatprep.mubr.bf16.mxu0 0
      %900 = vmatmul.mubr.bf16.gmra.mrb[0].mxu0 %v851
      %v901 = vpop.f32.mrb[0].mxu0
      %v902 = vadd.f32 0.0, %v901
      %v903 = vpop.f32.mrb[0].mxu0
      %v904 = vpop.f32.mrb[0].mxu0
      %v905 = vadd.f32 0.0, %v904
      %v906 = vpop.f32.mrb[0].mxu0
      %907 = vmatprep.mubr.bf16.mxu0 0
      %908 = vmatmul.mubr.bf16.gmra.mrb[0].mxu0 %v854
      %v909 = vpop.f32.mrb[0].mxu0
      %v910 = vadd.f32 0.0, %v909
      %v911 = vpop.f32.mrb[0].mxu0
      %v912 = vpop.f32.mrb[0].mxu0
      %v913 = vpop.f32.mrb[0].mxu0
      %914 = vdwg.mxu0
      %v915 = vadd.f32 %v796, %v894
      %v916 = vadd.f32 %v797, %v897
      %v917 = vadd.f32 %v798, %v902
      %v918 = vadd.f32 %v799, %v905
      %v919 = vadd.f32 %v800, %v910
      %920 = vst.msk [vmem:[#allocation2] sm:$0xff] %vm312, %v915
      %921 = vst.msk [vmem:[#allocation2 + $0x8] sm:$0xff] %vm312, %v916
      %922 = vst.msk [vmem:[#allocation2 + $0x10] sm:$0xff] %vm312, %v917
      %923 = vst.msk [vmem:[#allocation2 + $0x18] sm:$0xff] %vm312, %v918
      %924 = vst.msk [vmem:[#allocation2 + $0x20] sm:$0xff] %vm312, %v919
      %v925 = vld [vmem:[#allocation2] sm:$0xff]
      %v926 = vld [vmem:[#allocation2 + $0x8] sm:$0xff]
      %v927 = vld [vmem:[#allocation2 + $0x10] sm:$0xff]
      %v928 = vld [vmem:[#allocation2 + $0x18] sm:$0xff]
      %v929 = vld [vmem:[#allocation2 + $0x20] sm:$0xff]
      %v930 = vld [vmem:[%s206 + $0x4] sm:$0x8]
      %v931 = vld [vmem:[%s206 + $0x8] sm:$0xf]
      %v932 = vld [vmem:[%s206 + $0xc] sm:$0xf]
      %v933 = vld [vmem:[%s206 + $0x10] sm:$0xf]
      %v934 = vld [vmem:[%s206 + $0x14] sm:$0xf]
      %v935 = vld [vmem:[%s206 + $0x18] sm:$0x7]
      %s936 = scalar_lea.vmem %s210, 24
      %v937 = vld [vmem:[%s936] sm:$0xf]
      %v944 = vunpack.c.l.b16 %v930
      %v945 = vunpack.c.l.b16 %v931
      %v946 = vunpack.c.l.b16 %v932
      %v947 = vunpack.c.l.b16 %v933
      %v948 = vunpack.c.l.b16 %v934
      %v949 = vunpack.c.l.b16 %v935
      %v950 = vpack.c.b16 %v945, %v944
      %v951 = vpack.c.b16 %v947, %v946
      %v952 = vpack.c.b16 %v949, %v948
      %vm953 = vcmask 1044480
      %v954 = vrot.slane %v950, 3
      %v955 = vrot.slane %v951, 3
      %v956 = vsel %vm953, %v954, %v955
      %v957 = vrot.slane %v952, 3
      %v958 = vsel %vm953, %v955, %v957
      %v960 = vsel %vm242, %v956, 0
      %v963 = vsel %vm242, %v958, 0
      %v966 = vsel %vm242, %v957, 0
      %v969 = vsel %vm252, %v937, 0
      %971 = vmatprep.subr.bf16.mxu0 0
      %972 = vmatpush1.bf16.msra.mxu0 %v969
      %973 = vmatprep.subr.bf16.mxu0 0
      %974 = vmatpush1.bf16.msra.mxu0 0
      %975 = vmatprep.subr.bf16.mxu0 0
      %976 = vmatpush1.bf16.msra.mxu0 0
      %977 = vmatprep.subr.bf16.mxu0 0
      %978 = vmatpush1.bf16.msra.mxu0 0
      %979 = vmatprep.subr.bf16.mxu0 0
      %980 = vmatpush1.bf16.msra.mxu0 0
      %981 = vmatprep.subr.bf16.mxu0 0
      %982 = vmatpush1.bf16.msra.mxu0 0
      %983 = vmatprep.subr.bf16.mxu0 0
      %984 = vmatpush1.bf16.msra.mxu0 0
      %985 = vmatprep.subr.bf16.mxu0 0
      %986 = vmatpush1.bf16.msra.mxu0 0
      %987 = vmatprep.subr.bf16.mxu0 0
      %988 = vmatpush1.bf16.msra.mxu0 0
      %989 = vmatprep.subr.bf16.mxu0 0
      %990 = vmatpush1.bf16.msra.mxu0 0
      %991 = vmatprep.subr.bf16.mxu0 0
      %992 = vmatpush1.bf16.msra.mxu0 0
      %993 = vmatprep.subr.bf16.mxu0 0
      %994 = vmatpush1.bf16.msra.mxu0 0
      %995 = vmatprep.subr.bf16.mxu0 0
      %996 = vmatpush1.bf16.msra.mxu0 0
      %997 = vmatprep.subr.bf16.mxu0 0
      %998 = vmatpush1.bf16.msra.mxu0 0
      %999 = vmatprep.subr.bf16.mxu0 0
      %1000 = vmatpush1.bf16.msra.mxu0 0
      %1001 = vmatprep.subr.bf16.mxu0 0
      %1002 = vmatpush1.bf16.msra.mxu0 0
      %1003 = vmatprep.mubr.bf16.mxu0 0
      %1004 = vmatmul.mubr.bf16.gmra.mrb[0].mxu0 %v960
      %v1005 = vpop.f32.mrb[0].mxu0
      %v1006 = vadd.f32 0.0, %v1005
      %v1007 = vpop.f32.mrb[0].mxu0
      %v1008 = vpop.f32.mrb[0].mxu0
      %v1009 = vadd.f32 0.0, %v1008
      %v1010 = vpop.f32.mrb[0].mxu0
      %1011 = vmatprep.mubr.bf16.mxu0 0
      %1012 = vmatmul.mubr.bf16.gmra.mrb[0].mxu0 %v963
      %v1013 = vpop.f32.mrb[0].mxu0
      %v1014 = vadd.f32 0.0, %v1013
      %v1015 = vpop.f32.mrb[0].mxu0
      %v1016 = vpop.f32.mrb[0].mxu0
      %v1017 = vadd.f32 0.0, %v1016
      %v1018 = vpop.f32.mrb[0].mxu0
      %1019 = vmatprep.mubr.bf16.mxu0 0
      %1020 = vmatmul.mubr.bf16.gmra.mrb[0].mxu0 %v966
      %v1021 = vpop.f32.mrb[0].mxu0
      %v1022 = vadd.f32 0.0, %v1021
      %v1023 = vpop.f32.mrb[0].mxu0
      %v1024 = vpop.f32.mrb[0].mxu0
      %v1025 = vpop.f32.mrb[0].mxu0
      %1026 = vdwg.mxu0
      %v1027 = vadd.f32 %v925, %v1006
      %v1028 = vadd.f32 %v926, %v1009
      %v1029 = vadd.f32 %v927, %v1014
      %v1030 = vadd.f32 %v928, %v1017
      %v1031 = vadd.f32 %v929, %v1022
      %1032 = vst.msk [vmem:[#allocation2] sm:$0xff] %vm312, %v1027
      %1033 = vst.msk [vmem:[#allocation2 + $0x8] sm:$0xff] %vm312, %v1028
      %1034 = vst.msk [vmem:[#allocation2 + $0x10] sm:$0xff] %vm312, %v1029
      %1035 = vst.msk [vmem:[#allocation2 + $0x18] sm:$0xff] %vm312, %v1030
      %1036 = vst.msk [vmem:[#allocation2 + $0x20] sm:$0xff] %vm312, %v1031
      %v1037 = vld [vmem:[#allocation2] sm:$0xff]
      %v1038 = vld [vmem:[#allocation2 + $0x8] sm:$0xff]
      %v1039 = vld [vmem:[#allocation2 + $0x10] sm:$0xff]
      %v1040 = vld [vmem:[#allocation2 + $0x18] sm:$0xff]
      %v1041 = vld [vmem:[#allocation2 + $0x20] sm:$0xff]
      %v1042 = vld [vmem:[%s206 + $0x4] sm:$0x8]
      %v1043 = vld [vmem:[%s206 + $0x8] sm:$0xf]
      %v1044 = vld [vmem:[%s206 + $0xc] sm:$0xf]
      %v1045 = vld [vmem:[%s206 + $0x10] sm:$0xf]
      %v1046 = vld [vmem:[%s206 + $0x14] sm:$0xf]
      %v1047 = vld [vmem:[%s206 + $0x18] sm:$0xf]
      %s1048 = scalar_lea.vmem %s210, 28
      %v1049 = vld [vmem:[%s1048] sm:$0xf]
      %v1056 = vunpack.c.l.b16 %v1042
      %v1057 = vunpack.c.l.b16 %v1043
      %v1058 = vunpack.c.l.b16 %v1044
      %v1059 = vunpack.c.l.b16 %v1045
      %v1060 = vunpack.c.l.b16 %v1046
      %v1061 = vunpack.c.l.b16 %v1047
      %v1062 = vpack.c.b16 %v1057, %v1056
      %v1063 = vpack.c.b16 %v1059, %v1058
      %v1064 = vpack.c.b16 %v1061, %v1060
      %v1066 = vshrl.u32 %v1062, 16
      %v1068 = vrot.slane %v1066, 3
      %v1069 = vshll.u32 %v1062, 16
      %v1071 = vrot.slane %v1069, 4
      %v1072 = vor.u32 %v1068, %v1071
      %v1074 = vshrl.u32 %v1063, 16
      %v1076 = vrot.slane %v1074, 3
      %v1077 = vshll.u32 %v1063, 16
      %v1079 = vrot.slane %v1077, 4
      %v1080 = vor.u32 %v1076, %v1079
      %v1081 = vsel %vm588, %v1072, %v1080
      %v1083 = vshrl.u32 %v1064, 16
      %v1085 = vrot.slane %v1083, 3
      %v1086 = vshll.u32 %v1064, 16
      %v1088 = vrot.slane %v1086, 4
      %v1089 = vor.u32 %v1085, %v1088
      %v1090 = vsel %vm588, %v1080, %v1089
      %v1092 = vsel %vm242, %v1081, 0
      %v1095 = vsel %vm242, %v1090, 0
      %v1098 = vsel %vm242, %v1089, 0
      %v1101 = vsel %vm252, %v1049, 0
      %1103 = vmatprep.subr.bf16.mxu0 0
      %1104 = vmatpush1.bf16.msra.mxu0 %v1101
      %1105 = vmatprep.subr.bf16.mxu0 0
      %1106 = vmatpush1.bf16.msra.mxu0 0
      %1107 = vmatprep.subr.bf16.mxu0 0
      %1108 = vmatpush1.bf16.msra.mxu0 0
      %1109 = vmatprep.subr.bf16.mxu0 0
      %1110 = vmatpush1.bf16.msra.mxu0 0
      %1111 = vmatprep.subr.bf16.mxu0 0
      %1112 = vmatpush1.bf16.msra.mxu0 0
      %1113 = vmatprep.subr.bf16.mxu0 0
      %1114 = vmatpush1.bf16.msra.mxu0 0
      %1115 = vmatprep.subr.bf16.mxu0 0
      %1116 = vmatpush1.bf16.msra.mxu0 0
      %1117 = vmatprep.subr.bf16.mxu0 0
      %1118 = vmatpush1.bf16.msra.mxu0 0
      %1119 = vmatprep.subr.bf16.mxu0 0
      %1120 = vmatpush1.bf16.msra.mxu0 0
      %1121 = vmatprep.subr.bf16.mxu0 0
      %1122 = vmatpush1.bf16.msra.mxu0 0
      %1123 = vmatprep.subr.bf16.mxu0 0
      %1124 = vmatpush1.bf16.msra.mxu0 0
      %1125 = vmatprep.subr.bf16.mxu0 0
      %1126 = vmatpush1.bf16.msra.mxu0 0
      %1127 = vmatprep.subr.bf16.mxu0 0
      %1128 = vmatpush1.bf16.msra.mxu0 0
      %1129 = vmatprep.subr.bf16.mxu0 0
      %1130 = vmatpush1.bf16.msra.mxu0 0
      %1131 = vmatprep.subr.bf16.mxu0 0
      %1132 = vmatpush1.bf16.msra.mxu0 0
      %1133 = vmatprep.subr.bf16.mxu0 0
      %1134 = vmatpush1.bf16.msra.mxu0 0
      %1135 = vmatprep.mubr.bf16.mxu0 0
      %1136 = vmatmul.mubr.bf16.gmra.mrb[0].mxu0 %v1092
      %v1137 = vpop.f32.mrb[0].mxu0
      %v1138 = vadd.f32 0.0, %v1137
      %v1139 = vpop.f32.mrb[0].mxu0
      %v1140 = vpop.f32.mrb[0].mxu0
      %v1141 = vadd.f32 0.0, %v1140
      %v1142 = vpop.f32.mrb[0].mxu0
      %1143 = vmatprep.mubr.bf16.mxu0 0
      %1144 = vmatmul.mubr.bf16.gmra.mrb[0].mxu0 %v1095
      %v1145 = vpop.f32.mrb[0].mxu0
      %v1146 = vadd.f32 0.0, %v1145
      %v1147 = vpop.f32.mrb[0].mxu0
      %v1148 = vpop.f32.mrb[0].mxu0
      %v1149 = vadd.f32 0.0, %v1148
      %v1150 = vpop.f32.mrb[0].mxu0
      %1151 = vmatprep.mubr.bf16.mxu0 0
      %1152 = vmatmul.mubr.bf16.gmra.mrb[0].mxu0 %v1098
      %v1153 = vpop.f32.mrb[0].mxu0
      %v1154 = vadd.f32 0.0, %v1153
      %v1155 = vpop.f32.mrb[0].mxu0
      %v1156 = vpop.f32.mrb[0].mxu0
      %v1157 = vpop.f32.mrb[0].mxu0
      %1158 = vdwg.mxu0
      %v1159 = vadd.f32 %v1037, %v1138
      %v1160 = vadd.f32 %v1038, %v1141
      %v1161 = vadd.f32 %v1039, %v1146
      %v1162 = vadd.f32 %v1040, %v1149
      %v1163 = vadd.f32 %v1041, %v1154
      %1164 = vst.msk [vmem:[#allocation2] sm:$0xff] %vm312, %v1159
      %1165 = vst.msk [vmem:[#allocation2 + $0x8] sm:$0xff] %vm312, %v1160
      %1166 = vst.msk [vmem:[#allocation2 + $0x10] sm:$0xff] %vm312, %v1161
      %1167 = vst.msk [vmem:[#allocation2 + $0x18] sm:$0xff] %vm312, %v1162
      %1168 = vst.msk [vmem:[#allocation2 + $0x20] sm:$0xff] %vm312, %v1163
      %v1169 = vld [vmem:[#allocation2] sm:$0xff]
      %v1170 = vld [vmem:[#allocation2 + $0x8] sm:$0xff]
      %v1171 = vld [vmem:[#allocation2 + $0x10] sm:$0xff]
      %v1172 = vld [vmem:[#allocation2 + $0x18] sm:$0xff]
      %v1173 = vld [vmem:[#allocation2 + $0x20] sm:$0xff]
      %v1174 = vld [vmem:[%s206 + $0x8] sm:$0xf]
      %v1175 = vld [vmem:[%s206 + $0xc] sm:$0xf]
      %v1176 = vld [vmem:[%s206 + $0x10] sm:$0xf]
      %v1177 = vld [vmem:[%s206 + $0x14] sm:$0xf]
      %v1178 = vld [vmem:[%s206 + $0x18] sm:$0xf]
      %s1179 = scalar_lea.vmem %s210, 32
      %v1180 = vld [vmem:[%s1179] sm:$0xf]
      %v1186 = vunpack.c.l.b16 %v1174
      %v1187 = vunpack.c.l.b16 %v1175
      %v1188 = vunpack.c.l.b16 %v1176
      %v1189 = vunpack.c.l.b16 %v1177
      %v1190 = vunpack.c.l.b16 %v1178
      %v1191 = vpack.c.b16 %v1187, %v1186
      %v1192 = vpack.c.b16 %v1189, %v1188
      %v1193 = vpack.c.b16 %v1190, %v1190
      %v1195 = vsel %vm242, %v1191, 0
      %v1198 = vsel %vm242, %v1192, 0
      %v1201 = vsel %vm242, %v1193, 0
      %v1204 = vsel %vm252, %v1180, 0
      %1206 = vmatprep.subr.bf16.mxu0 0
      %1207 = vmatpush1.bf16.msra.mxu0 %v1204
      %1208 = vmatprep.subr.bf16.mxu0 0
      %1209 = vmatpush1.bf16.msra.mxu0 0
      %1210 = vmatprep.subr.bf16.mxu0 0
      %1211 = vmatpush1.bf16.msra.mxu0 0
      %1212 = vmatprep.subr.bf16.mxu0 0
      %1213 = vmatpush1.bf16.msra.mxu0 0
      %1214 = vmatprep.subr.bf16.mxu0 0
      %1215 = vmatpush1.bf16.msra.mxu0 0
      %1216 = vmatprep.subr.bf16.mxu0 0
      %1217 = vmatpush1.bf16.msra.mxu0 0
      %1218 = vmatprep.subr.bf16.mxu0 0
      %1219 = vmatpush1.bf16.msra.mxu0 0
      %1220 = vmatprep.subr.bf16.mxu0 0
      %1221 = vmatpush1.bf16.msra.mxu0 0
      %1222 = vmatprep.subr.bf16.mxu0 0
      %1223 = vmatpush1.bf16.msra.mxu0 0
      %1224 = vmatprep.subr.bf16.mxu0 0
      %1225 = vmatpush1.bf16.msra.mxu0 0
      %1226 = vmatprep.subr.bf16.mxu0 0
      %1227 = vmatpush1.bf16.msra.mxu0 0
      %1228 = vmatprep.subr.bf16.mxu0 0
      %1229 = vmatpush1.bf16.msra.mxu0 0
      %1230 = vmatprep.subr.bf16.mxu0 0
      %1231 = vmatpush1.bf16.msra.mxu0 0
      %1232 = vmatprep.subr.bf16.mxu0 0
      %1233 = vmatpush1.bf16.msra.mxu0 0
      %1234 = vmatprep.subr.bf16.mxu0 0
      %1235 = vmatpush1.bf16.msra.mxu0 0
      %1236 = vmatprep.subr.bf16.mxu0 0
      %1237 = vmatpush1.bf16.msra.mxu0 0
      %1238 = vmatprep.mubr.bf16.mxu0 0
      %1239 = vmatmul.mubr.bf16.gmra.mrb[0].mxu0 %v1195
      %v1240 = vpop.f32.mrb[0].mxu0
      %v1241 = vadd.f32 0.0, %v1240
      %v1242 = vpop.f32.mrb[0].mxu0
      %v1243 = vpop.f32.mrb[0].mxu0
      %v1244 = vadd.f32 0.0, %v1243
      %v1245 = vpop.f32.mrb[0].mxu0
      %1246 = vmatprep.mubr.bf16.mxu0 0
      %1247 = vmatmul.mubr.bf16.gmra.mrb[0].mxu0 %v1198
      %v1248 = vpop.f32.mrb[0].mxu0
      %v1249 = vadd.f32 0.0, %v1248
      %v1250 = vpop.f32.mrb[0].mxu0
      %v1251 = vpop.f32.mrb[0].mxu0
      %v1252 = vadd.f32 0.0, %v1251
      %v1253 = vpop.f32.mrb[0].mxu0
      %1254 = vmatprep.mubr.bf16.mxu0 0
      %1255 = vmatmul.mubr.bf16.gmra.mrb[0].mxu0 %v1201
      %v1256 = vpop.f32.mrb[0].mxu0
      %v1257 = vadd.f32 0.0, %v1256
      %v1258 = vpop.f32.mrb[0].mxu0
      %v1259 = vpop.f32.mrb[0].mxu0
      %v1260 = vpop.f32.mrb[0].mxu0
      %1261 = vdwg.mxu0
      %v1262 = vadd.f32 %v1169, %v1241
      %v1263 = vadd.f32 %v1170, %v1244
      %v1264 = vadd.f32 %v1171, %v1249
      %v1265 = vadd.f32 %v1172, %v1252
      %v1266 = vadd.f32 %v1173, %v1257
      %1267 = vst.msk [vmem:[#allocation2] sm:$0xff] %vm312, %v1262
      %1268 = vst.msk [vmem:[#allocation2 + $0x8] sm:$0xff] %vm312, %v1263
      %1269 = vst.msk [vmem:[#allocation2 + $0x10] sm:$0xff] %vm312, %v1264
      %1270 = vst.msk [vmem:[#allocation2 + $0x18] sm:$0xff] %vm312, %v1265
      %1271 = vst.msk [vmem:[#allocation2 + $0x20] sm:$0xff] %vm312, %v1266
      %v1272 = vld [vmem:[#allocation2] sm:$0xff]
      %v1273 = vld [vmem:[#allocation2 + $0x8] sm:$0xff]
      %v1274 = vld [vmem:[#allocation2 + $0x10] sm:$0xff]
      %v1275 = vld [vmem:[#allocation2 + $0x18] sm:$0xff]
      %v1276 = vld [vmem:[#allocation2 + $0x20] sm:$0xff]
      %v1277 = vld [vmem:[%s213] sm:$0x1]
      %v1279 = vlaneseq
      %v1280 = vshrl.u32 %v1279, 7
      %v1281 = vsub.s32 0, %v1280
      %v1282 = vrot.slane %v1277, %v1281
      %v1284 = vadd.f32 %v1272, %v1282
      %v1285 = vadd.f32 %v1273, %v1282
      %v1286 = vadd.f32 %v1274, %v1282
      %v1287 = vadd.f32 %v1275, %v1282
      %v1288 = vadd.f32 %v1276, %v1282
      %1289 = vst.msk [vmem:[%s221] sm:$0xff] %vm312, %v1284
      %1290 = vst.msk [vmem:[%s221 + $0x8] sm:$0xff] %vm312, %v1285
      %1291 = vst.msk [vmem:[%s221 + $0x10] sm:$0xff] %vm312, %v1286
      %1292 = vst.msk [vmem:[%s221 + $0x18] sm:$0xff] %vm312, %v1287
      %1293 = vst.msk [vmem:[%s221 + $0x20] sm:$0xff] %vm312, %v1288
      %p1294 = scmp.lt.s32.totalorder %s19, 1
      %s1295 = scalar_select %p1294, %s19, 1
      %p1296 = scmp.lt.s32.totalorder %s18, 0
      %s1297 = scalar_select %p1296, %s18, 0
      %s1298 = smul.addr %s1295, 5
      %s1299 = sadd.s32 %s1297, %s1298
      %s1300 = smul.addr %s1299, 8
      %s1301 = scalar_lea.vmem %s3, %s1300
      // Predicated region
      $region33: #{tpu_custom_call.1} parent=31 // pred_check
        %p1302 = pneg %p124
      $region34: #{tpu_custom_call.1} parent=31 // pred_check_branch
        %1304 = sbr.rel (%p1302) target = $region36
      $region35: #{tpu_custom_call.1} parent=31 // pred_region
        _
      $region36: #{tpu_custom_call.1} parent=31 // pred_fallthru
        _
    $region32: #{tpu_custom_call.1} parent=5 // pred_fallthru
      _
    %p1305 = scmp.le.s32.totalorder 2, %s9
    // Predicated region
    $region37: #{tpu_custom_call.1} parent=5 // pred_check
      %p1306 = pneg %p1305
    $region38: #{tpu_custom_call.1} parent=5 // pred_check_branch
      %1308 = sbr.rel (%p1306) target = $region40
    $region39: #{tpu_custom_call.1} parent=5 // pred_region
      %s1309 = ssub.s32 %s9, 2
      // Predicated region
      $region41: #{tpu_custom_call.1} parent=39 // pred_check
        %p1310 = pneg %p130
      $region42: #{tpu_custom_call.1} parent=39 // pred_check_branch
        %1312 = sbr.rel (%p1310) target = $region44
      $region43: #{tpu_custom_call.1} parent=39 // pred_region
        %p1313 = scmp.lt.s32.totalorder %s21, 1
        %s1314 = scalar_select %p1313, %s21, 1
        %p1315 = scmp.lt.s32.totalorder %s20, 0
        %s1316 = scalar_select %p1315, %s20, 0
        %s1317 = smul.addr %s1314, 5
        %s1318 = sadd.s32 %s1316, %s1317
        %s1319 = smul.addr %s1318, 8
        %s1320 = scalar_lea.vmem %s3, %s1319
      $region44: #{tpu_custom_call.1} parent=39 // pred_fallthru
        _
    $region40: #{tpu_custom_call.1} parent=5 // pred_fallthru
      _
  $region6: #{tpu_custom_call.1} parent=0 // loop_footer
    %s13 = sadd.s32 1, %s9
  $region7: #{tpu_custom_call.1} parent=0 // loop_footer_branch
    %8 = sbr.rel target = $region3
  $region8: #{tpu_custom_call.1} parent=0 // loop_exit
    _

</llo_original>
